<compile_context>
chip_gen: v7x
topology: tpu7x:2x2x1
jax: 0.10.0
libtpu: 0.0.40
codegen_flags: <defaults>
</compile_context>

<pallas_src>
import math
import functools

import jax
import jax.numpy as jnp
from jax.experimental import pallas as pl
from jax.experimental.pallas import tpu as pltpu


def _mha_kernel(q_ref, k_ref, v_ref,
                wq_ref, bq_ref, wk_ref, bk_ref, wv_ref, bv_ref,
                wo_ref, bo_ref, o_ref, *,
                num_heads, d_k, seq_len, batch_block, approx_recip):
    """One batch block per grid step.  bf16 MXU inputs, f32 accumulation."""
    d_embed = num_heads * d_k
    m = batch_block * seq_len

    x_q = q_ref[...].reshape(m, d_embed)      # bf16 activations (cast in wrapper)
    x_k = k_ref[...].reshape(m, d_embed)
    x_v = v_ref[...].reshape(m, d_embed)

    # Full-width projections (M, D) @ (D, D), f32 accumulation; the 1/sqrt(d_k)
    # score scale is already folded into wq/bq.  Cast back to bf16 *before* the
    # head split so the relayout below moves half the bytes.
    q = (jnp.dot(x_q, wq_ref[...], preferred_element_type=jnp.float32)
         + bq_ref[...]).astype(jnp.bfloat16)
    k = (jnp.dot(x_k, wk_ref[...], preferred_element_type=jnp.float32)
         + bk_ref[...]).astype(jnp.bfloat16)
    v = (jnp.dot(x_v, wv_ref[...], preferred_element_type=jnp.float32)
         + bv_ref[...]).astype(jnp.bfloat16)

    def split_heads(x):
        # (M, D) bf16 -> (num_heads * batch_block, S, d_k) bf16, heads stacked on
        # a leading batch axis via static lane slices; the trailing reshape only
        # regroups leading dims (valid since S % 8 == 0 or batch_block == 1).
        # TODO(synk): replace with a lane-splitting reshape + two-batch-dim einsum
        # ('bqhd,bkhd->bhqk') once Mosaic reliably lowers that dot_general form;
        # the stack-of-static-slices (now on bf16 data) is the known-good form.
        xh = jnp.stack([x[:, h * d_k:(h + 1) * d_k] for h in range(num_heads)],
                       axis=0)
        return xh.reshape(num_heads * batch_block, seq_len, d_k)

    qh = split_heads(q)
    kh = split_heads(k)
    vh = split_heads(v)

    # Batched attention over (head, batch) pairs (each pair only attends within
    # its own seq_len rows — batch and seq never mix).  Scale already in wq.
    s = jnp.einsum("bqd,bkd->bqk", qh, kh, preferred_element_type=jnp.float32)
    s_max = jnp.max(s, axis=-1, keepdims=True)
    p = jnp.exp(s - s_max)
    row_sum = jnp.sum(p, axis=-1, keepdims=True)

    # Deferred softmax normalization: unnormalized PV matmul first, then one
    # scale of (G, S, d_k) elements instead of (G, S, S).
    # TODO(synk): mask=None / eval-mode only — attention masking and training-mode
    # attn_dropout are not implemented (dropout is identity in eval).
    ctx = jnp.einsum("bqk,bkd->bqd", p.astype(jnp.bfloat16), vh,
                     preferred_element_type=jnp.float32)
    if approx_recip:
        ctx = ctx * pl.reciprocal(row_sum, approx=True)   # EUP slot, ~free
    else:
        ctx = ctx / row_sum                               # exact (default)

    # Head merge fused into the output projection: contract each head's context
    # against the matching d_k rows of Wo (== Wo reshaped to (H, d_k, D)) and
    # accumulate in f32.  No scratch, no masked narrow stores, no VMEM round trip.
    ctx_h = ctx.reshape(num_heads, m, d_k)
    acc = None
    for h in range(num_heads):
        part = jnp.dot(ctx_h[h].astype(jnp.bfloat16),
                       wo_ref[h * d_k:(h + 1) * d_k, :],
                       preferred_element_type=jnp.float32)
        acc = part if acc is None else acc + part
    out = acc + bo_ref[...]
    o_ref[...] = out.reshape(batch_block, seq_len, d_embed).astype(o_ref.dtype)


def multi_head_attention(query, key, value, params, *, num_heads,
                         batch_block=1, out_dtype=None, approx_recip=False,
                         vmem_limit_mb=48):
    """query/key/value: (B, S, D). params: (D, D) weights stored pre-transposed so
    y = x @ W + b (PyTorch nn.Linear keeps (out, in)); biases (1, D)."""
    B, S, D = query.shape
    assert D % num_heads == 0
    d_k = D // num_heads
    assert B % batch_block == 0
    if batch_block > 1:
        assert S % 8 == 0, "batch blocking needs seq_len to be sublane aligned"
    n_blocks = B // batch_block
    # Keep >= 2 grid steps when B allows it: the single "parallel" grid axis is
    # what feeds the second TensorCore on v7x (one step == one idle core there).
    out_dtype = query.dtype if out_dtype is None else out_dtype

    scale = 1.0 / math.sqrt(d_k)
    # Host-side prep: fold the score scale into the Q projection and cast matmul
    # operands to bf16 (halves weight/activation DMA, feeds the MXU at bf16 rate).
    # Biases stay f32 and are added post-accumulation.
    # TODO(synk): on v7x the static weights could optionally be pre-quantized to
    # fp8 with per-output-channel scales for ~2x MXU rate on the projections.
    wq = (params["wq"] * scale).astype(jnp.bfloat16)
    bq = (params["bq"] * scale).astype(jnp.float32)
    wk = params["wk"].astype(jnp.bfloat16)
    bk = params["bk"].astype(jnp.float32)
    wv = params["wv"].astype(jnp.bfloat16)
    bv = params["bv"].astype(jnp.float32)
    wo = params["wo"].astype(jnp.bfloat16)
    bo = params["bo"].astype(jnp.float32)
    q16 = query.astype(jnp.bfloat16)
    k16 = key.astype(jnp.bfloat16)
    v16 = value.astype(jnp.bfloat16)

    kernel = functools.partial(_mha_kernel, num_heads=num_heads, d_k=d_k,
                               seq_len=S, batch_block=batch_block,
                               approx_recip=approx_recip)

    act_spec = pl.BlockSpec((batch_block, S, D), lambda b: (b, 0, 0))
    # Weight/bias index_maps are grid-constant, so Pallas DMAs them once and the
    # copy stays resident across grid steps.  (On VMEM-tight chips — v7x, 64 MiB —
    # pipeline_mode=pl.Buffered(1) here would additionally drop their second
    # pipeline buffer, ~8*D^2 bytes for the four bf16 weights.)
    w_spec = pl.BlockSpec((D, D), lambda b: (0, 0))
    b_spec = pl.BlockSpec((1, D), lambda b: (0, 0))

    # TODO(synk): for long sequences, add an inner KV-tile grid axis ("arbitrary",
    # innermost) with running max/denominator scratch (flash softmax) instead of
    # materializing the (H*bb, S, S) f32 scores — that is what keeps full-size M
    # tiles viable on v7x's 64 MiB VMEM.
    return pl.pallas_call(
        kernel,
        out_shape=jax.ShapeDtypeStruct((B, S, D), out_dtype),
        grid=(n_blocks,),
        in_specs=[act_spec, act_spec, act_spec,
                  w_spec, b_spec, w_spec, b_spec, w_spec, b_spec,
                  w_spec, b_spec],
        out_specs=act_spec,
        compiler_params=pltpu.CompilerParams(
            dimension_semantics=("parallel",),
            vmem_limit_bytes=vmem_limit_mb * 1024 * 1024),
    )(q16, k16, v16, wq, bq, wk, bk, wv, bv, wo, bo)


def _reference(query, key, value, params, *, num_heads):
    """Plain-JAX fp32 reference mirroring the PyTorch forward (mask=None, eval)."""
    B, S, D = query.shape
    d_k = D // num_heads
    q = query @ params["wq"] + params["bq"]
    k = key @ params["wk"] + params["bk"]
    v = value @ params["wv"] + params["bv"]

    def split(x):  # (B,S,D) -> (B,H,S,d_k)
        return x.reshape(B, S, num_heads, d_k).transpose(0, 2, 1, 3)

    qh, kh, vh = split(q), split(k), split(v)
    scores = jnp.einsum("bhqd,bhkd->bhqk", qh, kh) / math.sqrt(d_k)
    attn = jax.nn.softmax(scores, axis=-1)
    ctx = jnp.einsum("bhqk,bhkd->bhqd", attn, vh)
    ctx = ctx.transpose(0, 2, 1, 3).reshape(B, S, D)
    return ctx @ params["wo"] + params["bo"]


if __name__ == "__main__":
    # Small shapes consistent with the module's forward.
    B, S, D, H = 2, 8, 32, 4

    key0 = jax.random.PRNGKey(0)
    keys = jax.random.split(key0, 12)

    def lin_init(kw, kb, fan_in, fan_out):
        # Deterministic init mimicking nn.Linear's uniform(-1/sqrt(fan_in), ...).
        bound = 1.0 / math.sqrt(fan_in)
        w = jax.random.uniform(kw, (fan_in, fan_out), jnp.float32, -bound, bound)
        b = jax.random.uniform(kb, (1, fan_out), jnp.float32, -bound, bound)
        return w, b

    wq, bq = lin_init(keys[0], keys[1], D, D)
    wk, bk = lin_init(keys[2], keys[3], D, D)
    wv, bv = lin_init(keys[4], keys[5], D, D)
    wo, bo = lin_init(keys[6], keys[7], D, D)
    params = dict(wq=wq, bq=bq, wk=wk, bk=bk, wv=wv, bv=bv, wo=wo, bo=bo)

    query = jax.random.normal(keys[8], (B, S, D), jnp.float32)
    key_in = jax.random.normal(keys[9], (B, S, D), jnp.float32)
    value = jax.random.normal(keys[10], (B, S, D), jnp.float32)

    out = multi_head_attention(query, key_in, value, params,
                               num_heads=H, batch_block=1)
    out = jax.block_until_ready(out)

    # bf16 MXU inputs (f32 accumulation) with an exact softmax divide: tolerance
    # tightened vs the previous approx-reciprocal version.
    ref = _reference(query, key_in, value, params, num_heads=H)
    assert jnp.allclose(out, ref, atol=5e-2, rtol=5e-2), "mismatch vs reference"

    print("KERNEL_OK")
</pallas_src>

<mosaic_0001>
module attributes {stable_mosaic.version = 11 : i64} {
  func.func @_mha_kernel(%arg0: i32, %arg1: memref<1x8x32xbf16, #tpu.memory_space<vmem>>, %arg2: memref<1x8x32xbf16, #tpu.memory_space<vmem>>, %arg3: memref<1x8x32xbf16, #tpu.memory_space<vmem>>, %arg4: memref<32x32xbf16, #tpu.memory_space<vmem>>, %arg5: memref<1x32xf32, #tpu.memory_space<vmem>>, %arg6: memref<32x32xbf16, #tpu.memory_space<vmem>>, %arg7: memref<1x32xf32, #tpu.memory_space<vmem>>, %arg8: memref<32x32xbf16, #tpu.memory_space<vmem>>, %arg9: memref<1x32xf32, #tpu.memory_space<vmem>>, %arg10: memref<32x32xbf16, #tpu.memory_space<vmem>>, %arg11: memref<1x32xf32, #tpu.memory_space<vmem>>, %arg12: memref<1x8x32xf32, #tpu.memory_space<vmem>>) attributes {dimension_semantics = [#tpu.dimension_semantics<parallel>], iteration_bounds = array<i64: 2>, scalar_prefetch = 0 : i64, scratch_operands = 0 : i64, tpu.core_type = #tpu.core_type<tc>, window_params = [{transform_indices = @transform_0, window_bounds = array<i64: 1, 8, 32>}, {transform_indices = @transform_1, window_bounds = array<i64: 1, 8, 32>}, {transform_indices = @transform_2, window_bounds = array<i64: 1, 8, 32>}, {pipeline_mode = #tpu.pipeline_mode<synchronous>, transform_indices = @transform_3, window_bounds = array<i64: 32, 32>}, {pipeline_mode = #tpu.pipeline_mode<synchronous>, transform_indices = @transform_4, window_bounds = array<i64: 1, 32>}, {pipeline_mode = #tpu.pipeline_mode<synchronous>, transform_indices = @transform_5, window_bounds = array<i64: 32, 32>}, {pipeline_mode = #tpu.pipeline_mode<synchronous>, transform_indices = @transform_6, window_bounds = array<i64: 1, 32>}, {pipeline_mode = #tpu.pipeline_mode<synchronous>, transform_indices = @transform_7, window_bounds = array<i64: 32, 32>}, {pipeline_mode = #tpu.pipeline_mode<synchronous>, transform_indices = @transform_8, window_bounds = array<i64: 1, 32>}, {pipeline_mode = #tpu.pipeline_mode<synchronous>, transform_indices = @transform_9, window_bounds = array<i64: 32, 32>}, {pipeline_mode = #tpu.pipeline_mode<synchronous>, transform_indices = @transform_10, window_bounds = array<i64: 1, 32>}, {transform_indices = @transform_11, window_bounds = array<i64: 1, 8, 32>}]} {
    %c0 = arith.constant 0 : index
    %c0_0 = arith.constant 0 : index
    %c0_1 = arith.constant 0 : index
    %0 = vector.load %arg1[%c0, %c0_0, %c0_1] : memref<1x8x32xbf16, #tpu.memory_space<vmem>>, vector<1x8x32xbf16>
    %1 = vector.shape_cast %0 : vector<1x8x32xbf16> to vector<8x32xbf16>
    %c0_2 = arith.constant 0 : index
    %c0_3 = arith.constant 0 : index
    %c0_4 = arith.constant 0 : index
    %2 = vector.load %arg2[%c0_2, %c0_3, %c0_4] : memref<1x8x32xbf16, #tpu.memory_space<vmem>>, vector<1x8x32xbf16>
    %3 = vector.shape_cast %2 : vector<1x8x32xbf16> to vector<8x32xbf16>
    %c0_5 = arith.constant 0 : index
    %c0_6 = arith.constant 0 : index
    %c0_7 = arith.constant 0 : index
    %4 = vector.load %arg3[%c0_5, %c0_6, %c0_7] : memref<1x8x32xbf16, #tpu.memory_space<vmem>>, vector<1x8x32xbf16>
    %5 = vector.shape_cast %4 : vector<1x8x32xbf16> to vector<8x32xbf16>
    %c0_8 = arith.constant 0 : index
    %c0_9 = arith.constant 0 : index
    %6 = vector.load %arg4[%c0_8, %c0_9] : memref<32x32xbf16, #tpu.memory_space<vmem>>, vector<32x32xbf16>
    %cst = arith.constant dense<0.000000e+00> : vector<8x32xf32>
    %7 = tpu.matmul %1, %6, %cst {dimension_numbers = #tpu.dot_dimension_numbers<[1], [0], [0], [1], [0, 0, 1, 1], [], []>} : vector<8x32xbf16>, vector<32x32xbf16>, vector<8x32xf32> -> vector<8x32xf32>
    %c0_10 = arith.constant 0 : index
    %c0_11 = arith.constant 0 : index
    %8 = vector.load %arg5[%c0_10, %c0_11] : memref<1x32xf32, #tpu.memory_space<vmem>>, vector<1x32xf32>
    %9 = vector.broadcast %8 : vector<1x32xf32> to vector<8x32xf32>
    %10 = arith.addf %7, %9 : vector<8x32xf32>
    %11 = arith.truncf %10 : vector<8x32xf32> to vector<8x32xbf16>
    %c0_12 = arith.constant 0 : index
    %c0_13 = arith.constant 0 : index
    %12 = vector.load %arg6[%c0_12, %c0_13] : memref<32x32xbf16, #tpu.memory_space<vmem>>, vector<32x32xbf16>
    %cst_14 = arith.constant dense<0.000000e+00> : vector<8x32xf32>
    %13 = tpu.matmul %3, %12, %cst_14 {dimension_numbers = #tpu.dot_dimension_numbers<[1], [0], [0], [1], [0, 0, 1, 1], [], []>} : vector<8x32xbf16>, vector<32x32xbf16>, vector<8x32xf32> -> vector<8x32xf32>
    %c0_15 = arith.constant 0 : index
    %c0_16 = arith.constant 0 : index
    %14 = vector.load %arg7[%c0_15, %c0_16] : memref<1x32xf32, #tpu.memory_space<vmem>>, vector<1x32xf32>
    %15 = vector.broadcast %14 : vector<1x32xf32> to vector<8x32xf32>
    %16 = arith.addf %13, %15 : vector<8x32xf32>
    %17 = arith.truncf %16 : vector<8x32xf32> to vector<8x32xbf16>
    %c0_17 = arith.constant 0 : index
    %c0_18 = arith.constant 0 : index
    %18 = vector.load %arg8[%c0_17, %c0_18] : memref<32x32xbf16, #tpu.memory_space<vmem>>, vector<32x32xbf16>
    %cst_19 = arith.constant dense<0.000000e+00> : vector<8x32xf32>
    %19 = tpu.matmul %5, %18, %cst_19 {dimension_numbers = #tpu.dot_dimension_numbers<[1], [0], [0], [1], [0, 0, 1, 1], [], []>} : vector<8x32xbf16>, vector<32x32xbf16>, vector<8x32xf32> -> vector<8x32xf32>
    %c0_20 = arith.constant 0 : index
    %c0_21 = arith.constant 0 : index
    %20 = vector.load %arg9[%c0_20, %c0_21] : memref<1x32xf32, #tpu.memory_space<vmem>>, vector<1x32xf32>
    %21 = vector.broadcast %20 : vector<1x32xf32> to vector<8x32xf32>
    %22 = arith.addf %19, %21 : vector<8x32xf32>
    %23 = arith.truncf %22 : vector<8x32xf32> to vector<8x32xbf16>
    %24 = vector.extract_strided_slice %11 {offsets = [0, 0], sizes = [8, 8], strides = [1, 1]} : vector<8x32xbf16> to vector<8x8xbf16>
    %25 = vector.extract_strided_slice %11 {offsets = [0, 8], sizes = [8, 8], strides = [1, 1]} : vector<8x32xbf16> to vector<8x8xbf16>
    %26 = vector.extract_strided_slice %11 {offsets = [0, 16], sizes = [8, 8], strides = [1, 1]} : vector<8x32xbf16> to vector<8x8xbf16>
    %27 = vector.extract_strided_slice %11 {offsets = [0, 24], sizes = [8, 8], strides = [1, 1]} : vector<8x32xbf16> to vector<8x8xbf16>
    %28 = vector.shape_cast %24 : vector<8x8xbf16> to vector<1x8x8xbf16>
    %29 = vector.shape_cast %25 : vector<8x8xbf16> to vector<1x8x8xbf16>
    %30 = vector.shape_cast %26 : vector<8x8xbf16> to vector<1x8x8xbf16>
    %31 = vector.shape_cast %27 : vector<8x8xbf16> to vector<1x8x8xbf16>
    %32 = tpu.concatenate %28, %29, %30, %31 in 0 : vector<1x8x8xbf16>, vector<1x8x8xbf16>, vector<1x8x8xbf16>, vector<1x8x8xbf16> -> vector<4x8x8xbf16>
    %33 = vector.extract_strided_slice %17 {offsets = [0, 0], sizes = [8, 8], strides = [1, 1]} : vector<8x32xbf16> to vector<8x8xbf16>
    %34 = vector.extract_strided_slice %17 {offsets = [0, 8], sizes = [8, 8], strides = [1, 1]} : vector<8x32xbf16> to vector<8x8xbf16>
    %35 = vector.extract_strided_slice %17 {offsets = [0, 16], sizes = [8, 8], strides = [1, 1]} : vector<8x32xbf16> to vector<8x8xbf16>
    %36 = vector.extract_strided_slice %17 {offsets = [0, 24], sizes = [8, 8], strides = [1, 1]} : vector<8x32xbf16> to vector<8x8xbf16>
    %37 = vector.shape_cast %33 : vector<8x8xbf16> to vector<1x8x8xbf16>
    %38 = vector.shape_cast %34 : vector<8x8xbf16> to vector<1x8x8xbf16>
    %39 = vector.shape_cast %35 : vector<8x8xbf16> to vector<1x8x8xbf16>
    %40 = vector.shape_cast %36 : vector<8x8xbf16> to vector<1x8x8xbf16>
    %41 = tpu.concatenate %37, %38, %39, %40 in 0 : vector<1x8x8xbf16>, vector<1x8x8xbf16>, vector<1x8x8xbf16>, vector<1x8x8xbf16> -> vector<4x8x8xbf16>
    %42 = vector.extract_strided_slice %23 {offsets = [0, 0], sizes = [8, 8], strides = [1, 1]} : vector<8x32xbf16> to vector<8x8xbf16>
    %43 = vector.extract_strided_slice %23 {offsets = [0, 8], sizes = [8, 8], strides = [1, 1]} : vector<8x32xbf16> to vector<8x8xbf16>
    %44 = vector.extract_strided_slice %23 {offsets = [0, 16], sizes = [8, 8], strides = [1, 1]} : vector<8x32xbf16> to vector<8x8xbf16>
    %45 = vector.extract_strided_slice %23 {offsets = [0, 24], sizes = [8, 8], strides = [1, 1]} : vector<8x32xbf16> to vector<8x8xbf16>
    %46 = vector.shape_cast %42 : vector<8x8xbf16> to vector<1x8x8xbf16>
    %47 = vector.shape_cast %43 : vector<8x8xbf16> to vector<1x8x8xbf16>
    %48 = vector.shape_cast %44 : vector<8x8xbf16> to vector<1x8x8xbf16>
    %49 = vector.shape_cast %45 : vector<8x8xbf16> to vector<1x8x8xbf16>
    %50 = tpu.concatenate %46, %47, %48, %49 in 0 : vector<1x8x8xbf16>, vector<1x8x8xbf16>, vector<1x8x8xbf16>, vector<1x8x8xbf16> -> vector<4x8x8xbf16>
    "tpu.trace_start"() <{level = 10 : i32, message = "bqd,bkd->bqk"}> : () -> ()
    %cst_22 = arith.constant dense<0.000000e+00> : vector<4x8x8xf32>
    %51 = tpu.matmul %32, %41, %cst_22 {dimension_numbers = #tpu.dot_dimension_numbers<[2], [2], [1], [1], [0, 0, 0, 1, 1, 1], [0], [0]>} : vector<4x8x8xbf16>, vector<4x8x8xbf16>, vector<4x8x8xf32> -> vector<4x8x8xf32>
    "tpu.trace_stop"() : () -> ()
    %cst_23 = arith.constant dense<0xFF800000> : vector<4x8xf32>
    %52 = vector.multi_reduction <maximumf>, %51, %cst_23 [2] : vector<4x8x8xf32> to vector<4x8xf32>
    %53 = vector.shape_cast %52 : vector<4x8xf32> to vector<4x8x1xf32>
    %54 = vector.broadcast %53 : vector<4x8x1xf32> to vector<4x8x8xf32>
    %55 = arith.subf %51, %54 : vector<4x8x8xf32>
    %56 = math.exp %55 : vector<4x8x8xf32>
    %cst_24 = arith.constant dense<0.000000e+00> : vector<4x8xf32>
    %57 = vector.multi_reduction <add>, %56, %cst_24 [2] : vector<4x8x8xf32> to vector<4x8xf32>
    %58 = vector.shape_cast %57 : vector<4x8xf32> to vector<4x8x1xf32>
    %59 = arith.truncf %56 : vector<4x8x8xf32> to vector<4x8x8xbf16>
    "tpu.trace_start"() <{level = 10 : i32, message = "bqk,bkd->bqd"}> : () -> ()
    %cst_25 = arith.constant dense<0.000000e+00> : vector<4x8x8xf32>
    %60 = tpu.matmul %59, %50, %cst_25 {dimension_numbers = #tpu.dot_dimension_numbers<[2], [1], [1], [2], [0, 0, 0, 1, 1, 2], [0], [0]>} : vector<4x8x8xbf16>, vector<4x8x8xbf16>, vector<4x8x8xf32> -> vector<4x8x8xf32>
    "tpu.trace_stop"() : () -> ()
    %61 = vector.broadcast %58 : vector<4x8x1xf32> to vector<4x8x8xf32>
    %62 = arith.divf %60, %61 : vector<4x8x8xf32>
    %63 = vector.extract_strided_slice %62 {offsets = [0, 0, 0], sizes = [1, 8, 8], strides = [1, 1, 1]} : vector<4x8x8xf32> to vector<1x8x8xf32>
    %64 = vector.shape_cast %63 : vector<1x8x8xf32> to vector<8x8xf32>
    %65 = arith.truncf %64 : vector<8x8xf32> to vector<8x8xbf16>
    %c0_26 = arith.constant 0 : index
    %c0_27 = arith.constant 0 : index
    %66 = vector.load %arg10[%c0_26, %c0_27] : memref<32x32xbf16, #tpu.memory_space<vmem>>, vector<8x32xbf16>
    %cst_28 = arith.constant dense<0.000000e+00> : vector<8x32xf32>
    %67 = tpu.matmul %65, %66, %cst_28 {dimension_numbers = #tpu.dot_dimension_numbers<[1], [0], [0], [1], [0, 0, 1, 1], [], []>} : vector<8x8xbf16>, vector<8x32xbf16>, vector<8x32xf32> -> vector<8x32xf32>
    %68 = vector.extract_strided_slice %62 {offsets = [1, 0, 0], sizes = [1, 8, 8], strides = [1, 1, 1]} : vector<4x8x8xf32> to vector<1x8x8xf32>
    %69 = vector.shape_cast %68 : vector<1x8x8xf32> to vector<8x8xf32>
    %70 = arith.truncf %69 : vector<8x8xf32> to vector<8x8xbf16>
    %c8 = arith.constant 8 : index
    %c0_29 = arith.constant 0 : index
    %71 = vector.load %arg10[%c8, %c0_29] : memref<32x32xbf16, #tpu.memory_space<vmem>>, vector<8x32xbf16>
    %cst_30 = arith.constant dense<0.000000e+00> : vector<8x32xf32>
    %72 = tpu.matmul %70, %71, %cst_30 {dimension_numbers = #tpu.dot_dimension_numbers<[1], [0], [0], [1], [0, 0, 1, 1], [], []>} : vector<8x8xbf16>, vector<8x32xbf16>, vector<8x32xf32> -> vector<8x32xf32>
    %73 = arith.addf %67, %72 : vector<8x32xf32>
    %74 = vector.extract_strided_slice %62 {offsets = [2, 0, 0], sizes = [1, 8, 8], strides = [1, 1, 1]} : vector<4x8x8xf32> to vector<1x8x8xf32>
    %75 = vector.shape_cast %74 : vector<1x8x8xf32> to vector<8x8xf32>
    %76 = arith.truncf %75 : vector<8x8xf32> to vector<8x8xbf16>
    %c16 = arith.constant 16 : index
    %c0_31 = arith.constant 0 : index
    %77 = vector.load %arg10[%c16, %c0_31] : memref<32x32xbf16, #tpu.memory_space<vmem>>, vector<8x32xbf16>
    %cst_32 = arith.constant dense<0.000000e+00> : vector<8x32xf32>
    %78 = tpu.matmul %76, %77, %cst_32 {dimension_numbers = #tpu.dot_dimension_numbers<[1], [0], [0], [1], [0, 0, 1, 1], [], []>} : vector<8x8xbf16>, vector<8x32xbf16>, vector<8x32xf32> -> vector<8x32xf32>
    %79 = arith.addf %73, %78 : vector<8x32xf32>
    %80 = vector.extract_strided_slice %62 {offsets = [3, 0, 0], sizes = [1, 8, 8], strides = [1, 1, 1]} : vector<4x8x8xf32> to vector<1x8x8xf32>
    %81 = vector.shape_cast %80 : vector<1x8x8xf32> to vector<8x8xf32>
    %82 = arith.truncf %81 : vector<8x8xf32> to vector<8x8xbf16>
    %c24 = arith.constant 24 : index
    %c0_33 = arith.constant 0 : index
    %83 = vector.load %arg10[%c24, %c0_33] : memref<32x32xbf16, #tpu.memory_space<vmem>>, vector<8x32xbf16>
    %cst_34 = arith.constant dense<0.000000e+00> : vector<8x32xf32>
    %84 = tpu.matmul %82, %83, %cst_34 {dimension_numbers = #tpu.dot_dimension_numbers<[1], [0], [0], [1], [0, 0, 1, 1], [], []>} : vector<8x8xbf16>, vector<8x32xbf16>, vector<8x32xf32> -> vector<8x32xf32>
    %85 = arith.addf %79, %84 : vector<8x32xf32>
    %c0_35 = arith.constant 0 : index
    %c0_36 = arith.constant 0 : index
    %86 = vector.load %arg11[%c0_35, %c0_36] : memref<1x32xf32, #tpu.memory_space<vmem>>, vector<1x32xf32>
    %87 = vector.broadcast %86 : vector<1x32xf32> to vector<8x32xf32>
    %88 = arith.addf %85, %87 : vector<8x32xf32>
    %89 = vector.shape_cast %88 : vector<8x32xf32> to vector<1x8x32xf32>
    %c0_37 = arith.constant 0 : index
    %c0_38 = arith.constant 0 : index
    %c0_39 = arith.constant 0 : index
    %90 = vector.load %arg12[%c0_37, %c0_38, %c0_39] : memref<1x8x32xf32, #tpu.memory_space<vmem>>, vector<1x8x32xf32>
    tpu.vector_store %arg12[%c0_37, %c0_38, %c0_39], %89 {strides = array<i32>} : memref<1x8x32xf32, #tpu.memory_space<vmem>>, vector<1x8x32xf32>,
    return
  }
  func.func @transform_0(%arg0: i32) -> (i32, i32, i32) {
    %c0_i32 = arith.constant 0 : i32
    %c0_i32_0 = arith.constant 0 : i32
    %c0_i32_1 = arith.constant 0 : i32
    return %arg0, %c0_i32, %c0_i32_0 : i32, i32, i32
  }
  func.func @transform_1(%arg0: i32) -> (i32, i32, i32) {
    %c0_i32 = arith.constant 0 : i32
    %c0_i32_0 = arith.constant 0 : i32
    %c0_i32_1 = arith.constant 0 : i32
    return %arg0, %c0_i32, %c0_i32_0 : i32, i32, i32
  }
  func.func @transform_2(%arg0: i32) -> (i32, i32, i32) {
    %c0_i32 = arith.constant 0 : i32
    %c0_i32_0 = arith.constant 0 : i32
    %c0_i32_1 = arith.constant 0 : i32
    return %arg0, %c0_i32, %c0_i32_0 : i32, i32, i32
  }
  func.func @transform_3(%arg0: i32) -> (i32, i32) {
    %c0_i32 = arith.constant 0 : i32
    %c0_i32_0 = arith.constant 0 : i32
    %c0_i32_1 = arith.constant 0 : i32
    return %c0_i32, %c0_i32_0 : i32, i32
  }
  func.func @transform_4(%arg0: i32) -> (i32, i32) {
    %c0_i32 = arith.constant 0 : i32
    %c0_i32_0 = arith.constant 0 : i32
    %c0_i32_1 = arith.constant 0 : i32
    return %c0_i32, %c0_i32_0 : i32, i32
  }
  func.func @transform_5(%arg0: i32) -> (i32, i32) {
    %c0_i32 = arith.constant 0 : i32
    %c0_i32_0 = arith.constant 0 : i32
    %c0_i32_1 = arith.constant 0 : i32
    return %c0_i32, %c0_i32_0 : i32, i32
  }
  func.func @transform_6(%arg0: i32) -> (i32, i32) {
    %c0_i32 = arith.constant 0 : i32
    %c0_i32_0 = arith.constant 0 : i32
    %c0_i32_1 = arith.constant 0 : i32
    return %c0_i32, %c0_i32_0 : i32, i32
  }
  func.func @transform_7(%arg0: i32) -> (i32, i32) {
    %c0_i32 = arith.constant 0 : i32
    %c0_i32_0 = arith.constant 0 : i32
    %c0_i32_1 = arith.constant 0 : i32
    return %c0_i32, %c0_i32_0 : i32, i32
  }
  func.func @transform_8(%arg0: i32) -> (i32, i32) {
    %c0_i32 = arith.constant 0 : i32
    %c0_i32_0 = arith.constant 0 : i32
    %c0_i32_1 = arith.constant 0 : i32
    return %c0_i32, %c0_i32_0 : i32, i32
  }
  func.func @transform_9(%arg0: i32) -> (i32, i32) {
    %c0_i32 = arith.constant 0 : i32
    %c0_i32_0 = arith.constant 0 : i32
    %c0_i32_1 = arith.constant 0 : i32
    return %c0_i32, %c0_i32_0 : i32, i32
  }
  func.func @transform_10(%arg0: i32) -> (i32, i32) {
    %c0_i32 = arith.constant 0 : i32
    %c0_i32_0 = arith.constant 0 : i32
    %c0_i32_1 = arith.constant 0 : i32
    return %c0_i32, %c0_i32_0 : i32, i32
  }
  func.func @transform_11(%arg0: i32) -> (i32, i32, i32) {
    %c0_i32 = arith.constant 0 : i32
    %c0_i32_0 = arith.constant 0 : i32
    %c0_i32_1 = arith.constant 0 : i32
    return %arg0, %c0_i32, %c0_i32_0 : i32, i32, i32
  }
}

</mosaic_0001>

<llo_original>
// kernel: tpu_custom_call.1
$region0: #{tpu_custom_call.1}
  #allocation0 [shape = 'u32[]', space=smem, size = 0x4, offset = 0x4, fixed_abs, tag = 'smem constant byte address 0x4 - core index']
  #allocation1 [shape = 'u32[144,128]{1,0:T(1,128)}', space=vmem, size = 0x12000, scoped, tag = 'internal scratch']
  %s0 = inlined_call_operand.hbm [shape: bf16[2,8,32], index: 0, kind: input, shape index: {}]
  %s1 = inlined_call_operand.hbm [shape: bf16[2,8,32], index: 1, kind: input, shape index: {}]
  %s2 = inlined_call_operand.hbm [shape: bf16[2,8,32], index: 2, kind: input, shape index: {}]
  %s3 = inlined_call_operand.hbm [shape: bf16[32,32], index: 3, kind: input, shape index: {}]
  %s4 = inlined_call_operand.vmem [shape: f32[1,32], index: 4, kind: input, shape index: {}]
  %s5 = inlined_call_operand.vmem [shape: bf16[32,32], index: 5, kind: input, shape index: {}]
  %s6 = inlined_call_operand.vmem [shape: f32[1,32], index: 6, kind: input, shape index: {}]
  %s7 = inlined_call_operand.hbm [shape: bf16[32,32], index: 7, kind: input, shape index: {}]
  %s8 = inlined_call_operand.hbm [shape: f32[1,32], index: 8, kind: input, shape index: {}]
  %s9 = inlined_call_operand.vmem [shape: bf16[32,32], index: 9, kind: input, shape index: {}]
  %s10 = inlined_call_operand.vmem [shape: f32[1,32], index: 10, kind: input, shape index: {}]
  %s11 = inlined_call_operand.hbm [shape: f32[2,8,32], index: 11, kind: output, shape index: {}]
  %s12 = sld [smem:[#allocation0]]
  $region101: #{tpu_custom_call.1} parent=0
    _
  %s14 = ssub.s32 1, %s12
  %s15 = scalar_select 0, %s14, %s12
  $region1: #{tpu_custom_call.1} parent=0
    #allocation2 [shape = 'u8[4096]{0}', space=vmem, size = 0x1000, scoped, tag = 'input window, operand 0']
    #allocation3 [shape = 's32[2]{0}', space=sflag, size = 0x8, scoped, tag = 'scoped memory for tpu_custom_call.1']
    #allocation4 [shape = 's32[2]{0}', space=sflag, size = 0x8, scoped, tag = 'scoped memory for tpu_custom_call.1']
    #allocation5 [shape = 'u8[4096]{0}', space=vmem, size = 0x1000, scoped, tag = 'input window, operand 1']
    #allocation6 [shape = 's32[2]{0}', space=sflag, size = 0x8, scoped, tag = 'scoped memory for tpu_custom_call.1']
    #allocation7 [shape = 'u8[4096]{0}', space=vmem, size = 0x1000, scoped, tag = 'input window, operand 2']
    #allocation8 [shape = 'u8[8192]{0}', space=vmem, size = 0x2000, scoped, tag = 'input window, operand 3, single buffered']
    #allocation9 [shape = 's32[1]{0}', space=sflag, size = 0x4, scoped, tag = 'scoped memory for tpu_custom_call.1']
    #allocation10 [shape = 'u8[8192]{0}', space=vmem, size = 0x2000, scoped, tag = 'input window, operand 7, single buffered']
    #allocation11 [shape = 'u8[512]{0}', space=vmem, size = 0x400, scoped, tag = 'input window, operand 8, single buffered']
    #allocation12 [shape = 's32[1]{0}', space=sflag, size = 0x4, scoped, tag = 'scoped memory for tpu_custom_call.1']
    #allocation13 [shape = 'u8[8192]{0}', space=vmem, size = 0x2000, scoped, tag = 'output window, operand 0']
    %16 = vsyncpa [#allocation3], 0
    %s17 = scalar_lea.sflag [#allocation3], 1
    %18 = vsyncpa %s17, 0
    %19 = vsyncpa [#allocation6], 0
    %s20 = scalar_lea.sflag [#allocation6], 1
    %21 = vsyncpa %s20, 0
    %22 = vsyncpa [#allocation9], 0
    %23 = vsyncpa [#allocation12], 0
    %24 = vsyncpa [#allocation4], 0
    %s25 = scalar_lea.sflag [#allocation4], 1
    %26 = vsyncpa %s25, 0
    loop: start=0, step=1, limit=4
    $region2: #{tpu_custom_call.1} parent=1 // loop_pre_header
      _
    $region3: #{tpu_custom_call.1} parent=1 // loop_header
      %s28 = sphi 0, %s32
      %p29 = scmp.ge.s32.totalorder %s28, 4
      %s38 = sphi 0, %s40
      %s41 = sphi 0, %s38
      %s42 = sphi 0, %s41
      %s58 = sphi 0, %s42
      %s64 = sphi 0, %s66
      %s67 = sphi 0, %s64
      %s68 = sphi 0, %s67
      %s84 = sphi 0, %s68
      %s90 = sphi 0, %s92
      %s93 = sphi 0, %s90
      %s94 = sphi 0, %s93
      %s110 = sphi 0, %s94
      %s114 = sphi 0, %s114
      %s116 = sphi 0, %s114
      %s117 = sphi 0, %s116
      %s131 = sphi 0, %s117
      %s135 = sphi 0, %s135
      %s137 = sphi 0, %s135
      %s138 = sphi 0, %s137
      %s152 = sphi 0, %s138
      %s156 = sphi 0, %s156
      %s158 = sphi 0, %s156
      %s159 = sphi 0, %s158
      %s173 = sphi 0, %s159
      %s177 = sphi 0, %s177
      %s179 = sphi 0, %s177
      %s180 = sphi 0, %s179
      %s194 = sphi 0, %s180
      %s198 = sphi 0, %s198
      %s200 = sphi 0, %s198
      %s201 = sphi 0, %s200
      %s215 = sphi 0, %s201
      %s219 = sphi 0, %s219
      %s221 = sphi 0, %s219
      %s222 = sphi 0, %s221
      %s236 = sphi 0, %s222
      %s240 = sphi 0, %s240
      %s242 = sphi 0, %s240
      %s243 = sphi 0, %s242
      %s257 = sphi 0, %s243
      %s261 = sphi 0, %s261
      %s263 = sphi 0, %s261
      %s264 = sphi 0, %s263
      %s278 = sphi 0, %s264
      %s284 = sphi 0, %s286
      %s287 = sphi 0, %s284
      %s288 = sphi 0, %s287
      %s304 = sphi 0, %s288
    $region4: #{tpu_custom_call.1} parent=1 // loop_header_branch
      %31 = sbr.rel (%p29) target = $region8
    $region5: #{tpu_custom_call.1} parent=1 // loop_body
      %s33 = ssub.s32 %s28, 1
      %s34 = ssub.s32 %s28, 2
      %s35 = sadd.s32 %s28, 1
      %s36 = ssub.s32 %s28, %s35
      %p37 = scmp.eq.s32.totalorder %s36, 0
      %s39 = sadd.s32 %s38, 1
      %s40 = scalar_select %p37, %s38, %s39
      %p43 = pneg %p37
      %p44 = scmp.eq.s32.totalorder %s28, 1
      %p45 = por %p43, %p44
      %p46 = scmp.ne.s32.totalorder %s38, %s41
      %p47 = scmp.eq.s32.totalorder %s28, 0
      %p48 = por %p46, %p47
      %p49 = scmp.ne.s32.totalorder %s38, %s41
      %p50 = scmp.eq.s32.totalorder %s33, 1
      %p51 = por %p49, %p50
      %p52 = scmp.ne.s32.totalorder %s41, %s42
      %p53 = scmp.eq.s32.totalorder %s33, 0
      %p54 = por %p52, %p53
      %p55 = scmp.ne.s32.totalorder %s41, %s42
      %p56 = scmp.eq.s32.totalorder %s34, 1
      %p57 = por %p55, %p56
      %p59 = scmp.ne.s32.totalorder %s42, %s58
      %p60 = scmp.eq.s32.totalorder %s34, 0
      %p61 = por %p59, %p60
      %s62 = ssub.s32 %s28, %s35
      %p63 = scmp.eq.s32.totalorder %s62, 0
      %s65 = sadd.s32 %s64, 1
      %s66 = scalar_select %p63, %s64, %s65
      %p69 = pneg %p63
      %p70 = scmp.eq.s32.totalorder %s28, 1
      %p71 = por %p69, %p70
      %p72 = scmp.ne.s32.totalorder %s64, %s67
      %p73 = scmp.eq.s32.totalorder %s28, 0
      %p74 = por %p72, %p73
      %p75 = scmp.ne.s32.totalorder %s64, %s67
      %p76 = scmp.eq.s32.totalorder %s33, 1
      %p77 = por %p75, %p76
      %p78 = scmp.ne.s32.totalorder %s67, %s68
      %p79 = scmp.eq.s32.totalorder %s33, 0
      %p80 = por %p78, %p79
      %p81 = scmp.ne.s32.totalorder %s67, %s68
      %p82 = scmp.eq.s32.totalorder %s34, 1
      %p83 = por %p81, %p82
      %p85 = scmp.ne.s32.totalorder %s68, %s84
      %p86 = scmp.eq.s32.totalorder %s34, 0
      %p87 = por %p85, %p86
      %s88 = ssub.s32 %s28, %s35
      %p89 = scmp.eq.s32.totalorder %s88, 0
      %s91 = sadd.s32 %s90, 1
      %s92 = scalar_select %p89, %s90, %s91
      %p95 = pneg %p89
      %p96 = scmp.eq.s32.totalorder %s28, 1
      %p97 = por %p95, %p96
      %p98 = scmp.ne.s32.totalorder %s90, %s93
      %p99 = scmp.eq.s32.totalorder %s28, 0
      %p100 = por %p98, %p99
      %p101 = scmp.ne.s32.totalorder %s90, %s93
      %p102 = scmp.eq.s32.totalorder %s33, 1
      %p103 = por %p101, %p102
      %p104 = scmp.ne.s32.totalorder %s93, %s94
      %p105 = scmp.eq.s32.totalorder %s33, 0
      %p106 = por %p104, %p105
      %p107 = scmp.ne.s32.totalorder %s93, %s94
      %p108 = scmp.eq.s32.totalorder %s34, 1
      %p109 = por %p107, %p108
      %p111 = scmp.ne.s32.totalorder %s94, %s110
      %p112 = scmp.eq.s32.totalorder %s34, 0
      %p113 = por %p111, %p112
      %s115 = sadd.s32 %s114, 1
      %p118 = scmp.eq.s32.totalorder %s28, 1
      %p119 = scmp.ne.s32.totalorder %s114, %s116
      %p120 = scmp.eq.s32.totalorder %s28, 0
      %p121 = por %p119, %p120
      %p122 = scmp.ne.s32.totalorder %s114, %s116
      %p123 = scmp.eq.s32.totalorder %s33, 1
      %p124 = por %p122, %p123
      %p125 = scmp.ne.s32.totalorder %s116, %s117
      %p126 = scmp.eq.s32.totalorder %s33, 0
      %p127 = por %p125, %p126
      %p128 = scmp.ne.s32.totalorder %s116, %s117
      %p129 = scmp.eq.s32.totalorder %s34, 1
      %p130 = por %p128, %p129
      %p132 = scmp.ne.s32.totalorder %s117, %s131
      %p133 = scmp.eq.s32.totalorder %s34, 0
      %p134 = por %p132, %p133
      %s136 = sadd.s32 %s135, 1
      %p139 = scmp.eq.s32.totalorder %s28, 1
      %p140 = scmp.ne.s32.totalorder %s135, %s137
      %p141 = scmp.eq.s32.totalorder %s28, 0
      %p142 = por %p140, %p141
      %p143 = scmp.ne.s32.totalorder %s135, %s137
      %p144 = scmp.eq.s32.totalorder %s33, 1
      %p145 = por %p143, %p144
      %p146 = scmp.ne.s32.totalorder %s137, %s138
      %p147 = scmp.eq.s32.totalorder %s33, 0
      %p148 = por %p146, %p147
      %p149 = scmp.ne.s32.totalorder %s137, %s138
      %p150 = scmp.eq.s32.totalorder %s34, 1
      %p151 = por %p149, %p150
      %p153 = scmp.ne.s32.totalorder %s138, %s152
      %p154 = scmp.eq.s32.totalorder %s34, 0
      %p155 = por %p153, %p154
      %s157 = sadd.s32 %s156, 1
      %p160 = scmp.eq.s32.totalorder %s28, 1
      %p161 = scmp.ne.s32.totalorder %s156, %s158
      %p162 = scmp.eq.s32.totalorder %s28, 0
      %p163 = por %p161, %p162
      %p164 = scmp.ne.s32.totalorder %s156, %s158
      %p165 = scmp.eq.s32.totalorder %s33, 1
      %p166 = por %p164, %p165
      %p167 = scmp.ne.s32.totalorder %s158, %s159
      %p168 = scmp.eq.s32.totalorder %s33, 0
      %p169 = por %p167, %p168
      %p170 = scmp.ne.s32.totalorder %s158, %s159
      %p171 = scmp.eq.s32.totalorder %s34, 1
      %p172 = por %p170, %p171
      %p174 = scmp.ne.s32.totalorder %s159, %s173
      %p175 = scmp.eq.s32.totalorder %s34, 0
      %p176 = por %p174, %p175
      %s178 = sadd.s32 %s177, 1
      %p181 = scmp.eq.s32.totalorder %s28, 1
      %p182 = scmp.ne.s32.totalorder %s177, %s179
      %p183 = scmp.eq.s32.totalorder %s28, 0
      %p184 = por %p182, %p183
      %p185 = scmp.ne.s32.totalorder %s177, %s179
      %p186 = scmp.eq.s32.totalorder %s33, 1
      %p187 = por %p185, %p186
      %p188 = scmp.ne.s32.totalorder %s179, %s180
      %p189 = scmp.eq.s32.totalorder %s33, 0
      %p190 = por %p188, %p189
      %p191 = scmp.ne.s32.totalorder %s179, %s180
      %p192 = scmp.eq.s32.totalorder %s34, 1
      %p193 = por %p191, %p192
      %p195 = scmp.ne.s32.totalorder %s180, %s194
      %p196 = scmp.eq.s32.totalorder %s34, 0
      %p197 = por %p195, %p196
      %s199 = sadd.s32 %s198, 1
      %p202 = scmp.eq.s32.totalorder %s28, 1
      %p203 = scmp.ne.s32.totalorder %s198, %s200
      %p204 = scmp.eq.s32.totalorder %s28, 0
      %p205 = por %p203, %p204
      %p206 = scmp.ne.s32.totalorder %s198, %s200
      %p207 = scmp.eq.s32.totalorder %s33, 1
      %p208 = por %p206, %p207
      %p209 = scmp.ne.s32.totalorder %s200, %s201
      %p210 = scmp.eq.s32.totalorder %s33, 0
      %p211 = por %p209, %p210
      %p212 = scmp.ne.s32.totalorder %s200, %s201
      %p213 = scmp.eq.s32.totalorder %s34, 1
      %p214 = por %p212, %p213
      %p216 = scmp.ne.s32.totalorder %s201, %s215
      %p217 = scmp.eq.s32.totalorder %s34, 0
      %p218 = por %p216, %p217
      %s220 = sadd.s32 %s219, 1
      %p223 = scmp.eq.s32.totalorder %s28, 1
      %p224 = scmp.ne.s32.totalorder %s219, %s221
      %p225 = scmp.eq.s32.totalorder %s28, 0
      %p226 = por %p224, %p225
      %p227 = scmp.ne.s32.totalorder %s219, %s221
      %p228 = scmp.eq.s32.totalorder %s33, 1
      %p229 = por %p227, %p228
      %p230 = scmp.ne.s32.totalorder %s221, %s222
      %p231 = scmp.eq.s32.totalorder %s33, 0
      %p232 = por %p230, %p231
      %p233 = scmp.ne.s32.totalorder %s221, %s222
      %p234 = scmp.eq.s32.totalorder %s34, 1
      %p235 = por %p233, %p234
      %p237 = scmp.ne.s32.totalorder %s222, %s236
      %p238 = scmp.eq.s32.totalorder %s34, 0
      %p239 = por %p237, %p238
      %s241 = sadd.s32 %s240, 1
      %p244 = scmp.eq.s32.totalorder %s28, 1
      %p245 = scmp.ne.s32.totalorder %s240, %s242
      %p246 = scmp.eq.s32.totalorder %s28, 0
      %p247 = por %p245, %p246
      %p248 = scmp.ne.s32.totalorder %s240, %s242
      %p249 = scmp.eq.s32.totalorder %s33, 1
      %p250 = por %p248, %p249
      %p251 = scmp.ne.s32.totalorder %s242, %s243
      %p252 = scmp.eq.s32.totalorder %s33, 0
      %p253 = por %p251, %p252
      %p254 = scmp.ne.s32.totalorder %s242, %s243
      %p255 = scmp.eq.s32.totalorder %s34, 1
      %p256 = por %p254, %p255
      %p258 = scmp.ne.s32.totalorder %s243, %s257
      %p259 = scmp.eq.s32.totalorder %s34, 0
      %p260 = por %p258, %p259
      %s262 = sadd.s32 %s261, 1
      %p265 = scmp.eq.s32.totalorder %s28, 1
      %p266 = scmp.ne.s32.totalorder %s261, %s263
      %p267 = scmp.eq.s32.totalorder %s28, 0
      %p268 = por %p266, %p267
      %p269 = scmp.ne.s32.totalorder %s261, %s263
      %p270 = scmp.eq.s32.totalorder %s33, 1
      %p271 = por %p269, %p270
      %p272 = scmp.ne.s32.totalorder %s263, %s264
      %p273 = scmp.eq.s32.totalorder %s33, 0
      %p274 = por %p272, %p273
      %p275 = scmp.ne.s32.totalorder %s263, %s264
      %p276 = scmp.eq.s32.totalorder %s34, 1
      %p277 = por %p275, %p276
      %p279 = scmp.ne.s32.totalorder %s264, %s278
      %p280 = scmp.eq.s32.totalorder %s34, 0
      %p281 = por %p279, %p280
      %s282 = ssub.s32 %s28, %s35
      %p283 = scmp.eq.s32.totalorder %s282, 0
      %s285 = sadd.s32 %s284, 1
      %s286 = scalar_select %p283, %s284, %s285
      %p289 = pneg %p283
      %p290 = scmp.eq.s32.totalorder %s28, 1
      %p291 = por %p289, %p290
      %p292 = scmp.ne.s32.totalorder %s284, %s287
      %p293 = scmp.eq.s32.totalorder %s28, 0
      %p294 = por %p292, %p293
      %p295 = scmp.ne.s32.totalorder %s284, %s287
      %p296 = scmp.eq.s32.totalorder %s33, 1
      %p297 = por %p295, %p296
      %p298 = scmp.ne.s32.totalorder %s287, %s288
      %p299 = scmp.eq.s32.totalorder %s33, 0
      %p300 = por %p298, %p299
      %p301 = scmp.ne.s32.totalorder %s287, %s288
      %p302 = scmp.eq.s32.totalorder %s34, 1
      %p303 = por %p301, %p302
      %p305 = scmp.ne.s32.totalorder %s288, %s304
      %p306 = scmp.eq.s32.totalorder %s34, 0
      %p307 = por %p305, %p306
      %p308 = scmp.le.s32.totalorder 1, %s28
      %p309 = scmp.lt.s32.totalorder %s28, 3
      %p310 = pnand %p308, %p309
      %p311 = pneg %p310
      // Predicated region
      $region9: #{tpu_custom_call.1} parent=5 // pred_check
        _
      $region10: #{tpu_custom_call.1} parent=5 // pred_check_branch
        %313 = sbr.rel (%p310) target = $region12
      $region11: #{tpu_custom_call.1} parent=5 // pred_region
        %s314 = ssub.s32 %s28, 1
        // Predicated region
        $region13: #{tpu_custom_call.1} parent=11 // pred_check
          %p315 = pneg %p127
        $region14: #{tpu_custom_call.1} parent=11 // pred_check_branch
          %317 = sbr.rel (%p315) target = $region16
        $region15: #{tpu_custom_call.1} parent=11 // pred_region
          %s319 = ssub.s32 256, 256
          %320 = vsyncadd [#allocation9], %s319
          %s321 = sshll.u32 [#allocation8], 4
          %s322 = int_to_ptr.vmem [resolvable:$true] %s321
          %327 = dma.hbm_to_vmem [thread:$0]  %s3, 256, %s322, [#allocation9], 64, 64, 4
        $region16: #{tpu_custom_call.1} parent=11 // pred_fallthru
          _
        // Predicated region
        $region17: #{tpu_custom_call.1} parent=11 // pred_check
          %p328 = pneg %p148
        $region18: #{tpu_custom_call.1} parent=11 // pred_check_branch
          %330 = sbr.rel (%p328) target = $region20
        $region19: #{tpu_custom_call.1} parent=11 // pred_region
          _
        $region20: #{tpu_custom_call.1} parent=11 // pred_fallthru
          _
        // Predicated region
        $region21: #{tpu_custom_call.1} parent=11 // pred_check
          %p331 = pneg %p169
        $region22: #{tpu_custom_call.1} parent=11 // pred_check_branch
          %333 = sbr.rel (%p331) target = $region24
        $region23: #{tpu_custom_call.1} parent=11 // pred_region
          _
        $region24: #{tpu_custom_call.1} parent=11 // pred_fallthru
          _
        // Predicated region
        $region25: #{tpu_custom_call.1} parent=11 // pred_check
          %p334 = pneg %p190
        $region26: #{tpu_custom_call.1} parent=11 // pred_check_branch
          %336 = sbr.rel (%p334) target = $region28
        $region27: #{tpu_custom_call.1} parent=11 // pred_region
          _
        $region28: #{tpu_custom_call.1} parent=11 // pred_fallthru
          _
        // Predicated region
        $region29: #{tpu_custom_call.1} parent=11 // pred_check
          %p337 = pneg %p211
        $region30: #{tpu_custom_call.1} parent=11 // pred_check_branch
          %339 = sbr.rel (%p337) target = $region32
        $region31: #{tpu_custom_call.1} parent=11 // pred_region
          %s341 = ssub.s32 256, 256
          %342 = vsyncadd [#allocation9], %s341
          %s343 = sshll.u32 [#allocation10], 4
          %s344 = int_to_ptr.vmem [resolvable:$true] %s343
          %349 = dma.hbm_to_vmem [thread:$0]  %s7, 256, %s344, [#allocation9], 64, 64, 4
        $region32: #{tpu_custom_call.1} parent=11 // pred_fallthru
          _
        // Predicated region
        $region33: #{tpu_custom_call.1} parent=11 // pred_check
          %p350 = pneg %p232
        $region34: #{tpu_custom_call.1} parent=11 // pred_check_branch
          %352 = sbr.rel (%p350) target = $region36
        $region35: #{tpu_custom_call.1} parent=11 // pred_region
          %s354 = ssub.s32 16, 16
          %355 = vsyncadd [#allocation12], %s354
          %s357 = sshll.u32 [#allocation11], 4
          %s358 = int_to_ptr.vmem [resolvable:$true] %s357
          %360 = dma.hbm_to_vmem [thread:$0]  %s8, 16, %s358, [#allocation12]
        $region36: #{tpu_custom_call.1} parent=11 // pred_fallthru
          _
        // Predicated region
        $region37: #{tpu_custom_call.1} parent=11 // pred_check
          %p361 = pneg %p253
        $region38: #{tpu_custom_call.1} parent=11 // pred_check_branch
          %363 = sbr.rel (%p361) target = $region40
        $region39: #{tpu_custom_call.1} parent=11 // pred_region
          _
        $region40: #{tpu_custom_call.1} parent=11 // pred_fallthru
          _
        // Predicated region
        $region41: #{tpu_custom_call.1} parent=11 // pred_check
          %p364 = pneg %p274
        $region42: #{tpu_custom_call.1} parent=11 // pred_check_branch
          %366 = sbr.rel (%p364) target = $region44
        $region43: #{tpu_custom_call.1} parent=11 // pred_region
          _
        $region44: #{tpu_custom_call.1} parent=11 // pred_fallthru
          _
      $region12: #{tpu_custom_call.1} parent=5 // pred_fallthru
        _
      %p367 = scmp.lt.s32.totalorder %s28, 2
      // Predicated region
      $region45: #{tpu_custom_call.1} parent=5 // pred_check
        %p368 = pneg %p367
      $region46: #{tpu_custom_call.1} parent=5 // pred_check_branch
        %370 = sbr.rel (%p368) target = $region48
      $region47: #{tpu_custom_call.1} parent=5 // pred_region
        // Predicated region
        $region49: #{tpu_custom_call.1} parent=47 // pred_check
          %p371 = pneg %p48
        $region50: #{tpu_custom_call.1} parent=47 // pred_check_branch
          %373 = sbr.rel (%p371) target = $region52
        $region51: #{tpu_custom_call.1} parent=47 // pred_region
          %s374 = sand.u32 %s38, 1
          %s375 = scalar_lea.sflag [#allocation3], %s374
          %s376 = sand.u32 %s38, 1
          %s377 = smul.addr %s376, 4
          %s378 = scalar_lea.vmem [#allocation2], %s377
          %s380 = ssub.s32 64, 64
          %381 = vsyncadd %s375, %s380
          %s382 = smul.addr %s28, 64
          %s383 = scalar_lea.hbm %s0, %s382
          %s385 = sshll.u32 %s378, 4
          %s386 = int_to_ptr.vmem [resolvable:$true] %s385
          %388 = dma.hbm_to_vmem [thread:$0]  %s383, 64, %s386, %s375
        $region52: #{tpu_custom_call.1} parent=47 // pred_fallthru
          _
        // Predicated region
        $region53: #{tpu_custom_call.1} parent=47 // pred_check
          %p389 = pneg %p74
        $region54: #{tpu_custom_call.1} parent=47 // pred_check_branch
          %391 = sbr.rel (%p389) target = $region56
        $region55: #{tpu_custom_call.1} parent=47 // pred_region
          %s392 = sand.u32 %s28, 1
          %s393 = scalar_lea.sflag [#allocation6], %s392
          %s394 = sand.u32 %s64, 1
          %s395 = smul.addr %s394, 4
          %s396 = scalar_lea.vmem [#allocation5], %s395
          %s398 = ssub.s32 64, 64
          %399 = vsyncadd %s393, %s398
          %s400 = smul.addr %s28, 64
          %s401 = scalar_lea.hbm %s1, %s400
          %s403 = sshll.u32 %s396, 4
          %s404 = int_to_ptr.vmem [resolvable:$true] %s403
          %406 = dma.hbm_to_vmem [thread:$0]  %s401, 64, %s404, %s393
        $region56: #{tpu_custom_call.1} parent=47 // pred_fallthru
          _
        // Predicated region
        $region57: #{tpu_custom_call.1} parent=47 // pred_check
          %p407 = pneg %p100
        $region58: #{tpu_custom_call.1} parent=47 // pred_check_branch
          %409 = sbr.rel (%p407) target = $region60
        $region59: #{tpu_custom_call.1} parent=47 // pred_region
          %s410 = sand.u32 %s28, 1
          %s411 = scalar_lea.sflag [#allocation6], %s410
          %s412 = sand.u32 %s90, 1
          %s413 = smul.addr %s412, 4
          %s414 = scalar_lea.vmem [#allocation7], %s413
          %s416 = ssub.s32 64, 64
          %417 = vsyncadd %s411, %s416
          %s418 = smul.addr %s28, 64
          %s419 = scalar_lea.hbm %s2, %s418
          %s421 = sshll.u32 %s414, 4
          %s422 = int_to_ptr.vmem [resolvable:$true] %s421
          %424 = dma.hbm_to_vmem [thread:$0]  %s419, 64, %s422, %s411
        $region60: #{tpu_custom_call.1} parent=47 // pred_fallthru
          _
      $region48: #{tpu_custom_call.1} parent=5 // pred_fallthru
        _
      %p425 = scmp.le.s32.totalorder 1, %s28
      %p426 = scmp.lt.s32.totalorder %s28, 3
      %p427 = pnand %p425, %p426
      %p428 = pneg %p427
      // Predicated region
      $region61: #{tpu_custom_call.1} parent=5 // pred_check
        _
      $region62: #{tpu_custom_call.1} parent=5 // pred_check_branch
        %430 = sbr.rel (%p427) target = $region64
      $region63: #{tpu_custom_call.1} parent=5 // pred_region
        %s431 = ssub.s32 %s28, 1
        %s432 = sand.u32 %s41, 1
        %s433 = scalar_lea.sflag [#allocation3], %s432
        %s434 = sand.u32 %s41, 1
        %s435 = smul.addr %s434, 4
        %s436 = scalar_lea.vmem [#allocation2], %s435
        // Predicated region
        $region65: #{tpu_custom_call.1} parent=63 // pred_check
          %p437 = pneg %p54
        $region66: #{tpu_custom_call.1} parent=63 // pred_check_branch
          %439 = sbr.rel (%p437) target = $region68
        $region67: #{tpu_custom_call.1} parent=63 // pred_region
          %440 = dma.done %s433, 64
        $region68: #{tpu_custom_call.1} parent=63 // pred_fallthru
          _
        %s441 = sand.u32 %s33, 1
        %s442 = scalar_lea.sflag [#allocation6], %s441
        %s443 = sand.u32 %s67, 1
        %s444 = smul.addr %s443, 4
        %s445 = scalar_lea.vmem [#allocation5], %s444
        // Predicated region
        $region69: #{tpu_custom_call.1} parent=63 // pred_check
          %p446 = pneg %p80
        $region70: #{tpu_custom_call.1} parent=63 // pred_check_branch
          %448 = sbr.rel (%p446) target = $region72
        $region71: #{tpu_custom_call.1} parent=63 // pred_region
          %449 = dma.done %s442, 64
        $region72: #{tpu_custom_call.1} parent=63 // pred_fallthru
          _
        %s450 = sand.u32 %s33, 1
        %s451 = scalar_lea.sflag [#allocation6], %s450
        %s452 = sand.u32 %s93, 1
        %s453 = smul.addr %s452, 4
        %s454 = scalar_lea.vmem [#allocation7], %s453
        // Predicated region
        $region73: #{tpu_custom_call.1} parent=63 // pred_check
          %p455 = pneg %p106
        $region74: #{tpu_custom_call.1} parent=63 // pred_check_branch
          %457 = sbr.rel (%p455) target = $region76
        $region75: #{tpu_custom_call.1} parent=63 // pred_region
          %458 = dma.done %s451, 64
        $region76: #{tpu_custom_call.1} parent=63 // pred_fallthru
          _
        // Predicated region
        $region77: #{tpu_custom_call.1} parent=63 // pred_check
          %p459 = pneg %p127
        $region78: #{tpu_custom_call.1} parent=63 // pred_check_branch
          %461 = sbr.rel (%p459) target = $region80
        $region79: #{tpu_custom_call.1} parent=63 // pred_region
          %462 = dma.done [#allocation9], 256
        $region80: #{tpu_custom_call.1} parent=63 // pred_fallthru
          _
        // Predicated region
        $region81: #{tpu_custom_call.1} parent=63 // pred_check
          %p463 = pneg %p211
        $region82: #{tpu_custom_call.1} parent=63 // pred_check_branch
          %465 = sbr.rel (%p463) target = $region84
        $region83: #{tpu_custom_call.1} parent=63 // pred_region
          %466 = dma.done [#allocation9], 256
        $region84: #{tpu_custom_call.1} parent=63 // pred_fallthru
          _
        // Predicated region
        $region85: #{tpu_custom_call.1} parent=63 // pred_check
          %p467 = pneg %p232
        $region86: #{tpu_custom_call.1} parent=63 // pred_check_branch
          %469 = sbr.rel (%p467) target = $region88
        $region87: #{tpu_custom_call.1} parent=63 // pred_region
          %470 = dma.done [#allocation12], 16
        $region88: #{tpu_custom_call.1} parent=63 // pred_fallthru
          _
        %s471 = sand.u32 %s41, 1
        %s472 = scalar_lea.sflag [#allocation3], %s471
        %s473 = sand.u32 %s41, 1
        %s474 = smul.addr %s473, 4
        %s475 = scalar_lea.vmem [#allocation2], %s474
        %p476 = pneg %p54
        %p477 = pneg %p51
        %s478 = sand.u32 %s33, 1
        %s479 = scalar_lea.sflag [#allocation6], %s478
        %s480 = sand.u32 %s67, 1
        %s481 = smul.addr %s480, 4
        %s482 = scalar_lea.vmem [#allocation5], %s481
        %p483 = pneg %p80
        %p484 = pneg %p77
        %s485 = sand.u32 %s33, 1
        %s486 = scalar_lea.sflag [#allocation6], %s485
        %s487 = sand.u32 %s93, 1
        %s488 = smul.addr %s487, 4
        %s489 = scalar_lea.vmem [#allocation7], %s488
        %p490 = pneg %p106
        %p491 = pneg %p103
        %p492 = pneg %p127
        %p493 = pneg %p124
        %p494 = pneg %p148
        %p495 = pneg %p145
        %p496 = pneg %p169
        %p497 = pneg %p166
        %p498 = pneg %p190
        %p499 = pneg %p187
        %p500 = pneg %p211
        %p501 = pneg %p208
        %p502 = pneg %p232
        %p503 = pneg %p229
        %p504 = pneg %p253
        %p505 = pneg %p250
        %p506 = pneg %p274
        %p507 = pneg %p271
        %p508 = pneg %p300
        %p509 = pneg %p297
        %s510 = sand.u32 %s287, 1
        %s511 = scalar_lea.sflag [#allocation4], %s510
        %s512 = sand.u32 %s287, 1
        %s513 = smul.addr %s512, 8
        %s514 = scalar_lea.vmem [#allocation13], %s513
        %v516 = vld [vmem:[%s436] sm:$0xf]
        %v517 = vld [vmem:[%s445] sm:$0xf]
        %v518 = vld [vmem:[%s454] sm:$0xf]
        %v519 = vld [vmem:[#allocation8] sm:$0xf]
        %v520 = vld [vmem:[#allocation8 + $0x4] sm:$0xf]
        %v521 = vld [vmem:[#allocation8 + $0x8] sm:$0xf]
        %v522 = vld [vmem:[#allocation8 + $0xc] sm:$0xf]
        %v523 = vld [vmem:[%s4] sm:$0x1]
        %v525 = vlaneseq
        %v526 = vshrl.u32 %v525, 7
        %v527 = vsub.s32 0, %v526
        %v528 = vrot.slane %v523, %v527
        %v534 = vunpack.c.l.b16 %v519
        %v535 = vunpack.c.l.b16 %v520
        %v536 = vunpack.c.l.b16 %v521
        %v537 = vunpack.c.l.b16 %v522
        %v538 = vpack.c.b16 %v535, %v534
        %v539 = vpack.c.b16 %v537, %v536
        %vm542 = vcmask 261120
        %v544 = vsel %vm542, %v516, 0
        %546 = vmatprep.subr.bf16.mxu0 0
        %547 = vmatpush1.bf16.msra.mxu0 %v538
        %548 = vmatprep.subr.bf16.mxu0 0
        %549 = vmatpush1.bf16.msra.mxu0 %v539
        %550 = vmatprep.subr.bf16.mxu0 0
        %551 = vmatpush1.bf16.msra.mxu0 0
        %552 = vmatprep.subr.bf16.mxu0 0
        %553 = vmatpush1.bf16.msra.mxu0 0
        %554 = vmatprep.subr.bf16.mxu0 0
        %555 = vmatpush1.bf16.msra.mxu0 0
        %556 = vmatprep.subr.bf16.mxu0 0
        %557 = vmatpush1.bf16.msra.mxu0 0
        %558 = vmatprep.subr.bf16.mxu0 0
        %559 = vmatpush1.bf16.msra.mxu0 0
        %560 = vmatprep.subr.bf16.mxu0 0
        %561 = vmatpush1.bf16.msra.mxu0 0
        %562 = vmatprep.subr.bf16.mxu0 0
        %563 = vmatpush1.bf16.msra.mxu0 0
        %564 = vmatprep.subr.bf16.mxu0 0
        %565 = vmatpush1.bf16.msra.mxu0 0
        %566 = vmatprep.subr.bf16.mxu0 0
        %567 = vmatpush1.bf16.msra.mxu0 0
        %568 = vmatprep.subr.bf16.mxu0 0
        %569 = vmatpush1.bf16.msra.mxu0 0
        %570 = vmatprep.subr.bf16.mxu0 0
        %571 = vmatpush1.bf16.msra.mxu0 0
        %572 = vmatprep.subr.bf16.mxu0 0
        %573 = vmatpush1.bf16.msra.mxu0 0
        %574 = vmatprep.subr.bf16.mxu0 0
        %575 = vmatpush1.bf16.msra.mxu0 0
        %576 = vmatprep.subr.bf16.mxu0 0
        %577 = vmatpush1.bf16.msra.mxu0 0
        %578 = vmatprep.mubr.bf16.mxu0 0
        %579 = vmatmul.mubr.bf16.gmra.mrb[0].mxu0 %v544
        %v580 = vpop.f32.mrb[0].mxu0
        %v581 = vadd.f32 %v528, %v580
        %v582 = vpop.f32.mrb[0].mxu0
        %v583 = vpop.f32.mrb[0].mxu0
        %v584 = vpop.f32.mrb[0].mxu0
        %585 = vdwg.mxu0
        %v586 = vpack.c.bf16 %v581, %v581
        %v587 = vld [vmem:[%s5] sm:$0xf]
        %v588 = vld [vmem:[%s5 + $0x4] sm:$0xf]
        %v589 = vld [vmem:[%s5 + $0x8] sm:$0xf]
        %v590 = vld [vmem:[%s5 + $0xc] sm:$0xf]
        %v591 = vld [vmem:[%s6] sm:$0x1]
        %v593 = vlaneseq
        %v594 = vshrl.u32 %v593, 7
        %v595 = vsub.s32 0, %v594
        %v596 = vrot.slane %v591, %v595
        %v602 = vunpack.c.l.b16 %v587
        %v603 = vunpack.c.l.b16 %v588
        %v604 = vunpack.c.l.b16 %v589
        %v605 = vunpack.c.l.b16 %v590
        %v606 = vpack.c.b16 %v603, %v602
        %v607 = vpack.c.b16 %v605, %v604
        %v611 = vsel %vm542, %v517, 0
        %613 = vmatprep.subr.bf16.mxu0 0
        %614 = vmatpush1.bf16.msra.mxu0 %v606
        %615 = vmatprep.subr.bf16.mxu0 0
        %616 = vmatpush1.bf16.msra.mxu0 %v607
        %617 = vmatprep.subr.bf16.mxu0 0
        %618 = vmatpush1.bf16.msra.mxu0 0
        %619 = vmatprep.subr.bf16.mxu0 0
        %620 = vmatpush1.bf16.msra.mxu0 0
        %621 = vmatprep.subr.bf16.mxu0 0
        %622 = vmatpush1.bf16.msra.mxu0 0
        %623 = vmatprep.subr.bf16.mxu0 0
        %624 = vmatpush1.bf16.msra.mxu0 0
        %625 = vmatprep.subr.bf16.mxu0 0
        %626 = vmatpush1.bf16.msra.mxu0 0
        %627 = vmatprep.subr.bf16.mxu0 0
        %628 = vmatpush1.bf16.msra.mxu0 0
        %629 = vmatprep.subr.bf16.mxu0 0
        %630 = vmatpush1.bf16.msra.mxu0 0
        %631 = vmatprep.subr.bf16.mxu0 0
        %632 = vmatpush1.bf16.msra.mxu0 0
        %633 = vmatprep.subr.bf16.mxu0 0
        %634 = vmatpush1.bf16.msra.mxu0 0
        %635 = vmatprep.subr.bf16.mxu0 0
        %636 = vmatpush1.bf16.msra.mxu0 0
        %637 = vmatprep.subr.bf16.mxu0 0
        %638 = vmatpush1.bf16.msra.mxu0 0
        %639 = vmatprep.subr.bf16.mxu0 0
        %640 = vmatpush1.bf16.msra.mxu0 0
        %641 = vmatprep.subr.bf16.mxu0 0
        %642 = vmatpush1.bf16.msra.mxu0 0
        %643 = vmatprep.subr.bf16.mxu0 0
        %644 = vmatpush1.bf16.msra.mxu0 0
        %645 = vmatprep.mubr.bf16.mxu0 0
        %646 = vmatmul.mubr.bf16.gmra.mrb[0].mxu0 %v611
        %v647 = vpop.f32.mrb[0].mxu0
        %v648 = vadd.f32 %v596, %v647
        %v649 = vpop.f32.mrb[0].mxu0
        %v650 = vpop.f32.mrb[0].mxu0
        %v651 = vpop.f32.mrb[0].mxu0
        %652 = vdwg.mxu0
        %v653 = vpack.c.bf16 %v648, %v648
        %v654 = vld [vmem:[#allocation10] sm:$0xf]
        %v655 = vld [vmem:[#allocation10 + $0x4] sm:$0xf]
        %v656 = vld [vmem:[#allocation10 + $0x8] sm:$0xf]
        %v657 = vld [vmem:[#allocation10 + $0xc] sm:$0xf]
        %v658 = vld [vmem:[#allocation11] sm:$0x1]
        %v660 = vlaneseq
        %v661 = vshrl.u32 %v660, 7
        %v662 = vsub.s32 0, %v661
        %v663 = vrot.slane %v658, %v662
        %v669 = vunpack.c.l.b16 %v654
        %v670 = vunpack.c.l.b16 %v655
        %v671 = vunpack.c.l.b16 %v656
        %v672 = vunpack.c.l.b16 %v657
        %v673 = vpack.c.b16 %v670, %v669
        %v674 = vpack.c.b16 %v672, %v671
        %v678 = vsel %vm542, %v518, 0
        %680 = vmatprep.subr.bf16.mxu0 0
        %681 = vmatpush1.bf16.msra.mxu0 %v673
        %682 = vmatprep.subr.bf16.mxu0 0
        %683 = vmatpush1.bf16.msra.mxu0 %v674
        %684 = vmatprep.subr.bf16.mxu0 0
        %685 = vmatpush1.bf16.msra.mxu0 0
        %686 = vmatprep.subr.bf16.mxu0 0
        %687 = vmatpush1.bf16.msra.mxu0 0
        %688 = vmatprep.subr.bf16.mxu0 0
        %689 = vmatpush1.bf16.msra.mxu0 0
        %690 = vmatprep.subr.bf16.mxu0 0
        %691 = vmatpush1.bf16.msra.mxu0 0
        %692 = vmatprep.subr.bf16.mxu0 0
        %693 = vmatpush1.bf16.msra.mxu0 0
        %694 = vmatprep.subr.bf16.mxu0 0
        %695 = vmatpush1.bf16.msra.mxu0 0
        %696 = vmatprep.subr.bf16.mxu0 0
        %697 = vmatpush1.bf16.msra.mxu0 0
        %698 = vmatprep.subr.bf16.mxu0 0
        %699 = vmatpush1.bf16.msra.mxu0 0
        %700 = vmatprep.subr.bf16.mxu0 0
        %701 = vmatpush1.bf16.msra.mxu0 0
        %702 = vmatprep.subr.bf16.mxu0 0
        %703 = vmatpush1.bf16.msra.mxu0 0
        %704 = vmatprep.subr.bf16.mxu0 0
        %705 = vmatpush1.bf16.msra.mxu0 0
        %706 = vmatprep.subr.bf16.mxu0 0
        %707 = vmatpush1.bf16.msra.mxu0 0
        %708 = vmatprep.subr.bf16.mxu0 0
        %709 = vmatpush1.bf16.msra.mxu0 0
        %710 = vmatprep.subr.bf16.mxu0 0
        %711 = vmatpush1.bf16.msra.mxu0 0
        %712 = vmatprep.mubr.bf16.mxu0 0
        %713 = vmatmul.mubr.bf16.gmra.mrb[0].mxu0 %v678
        %v714 = vpop.f32.mrb[0].mxu0
        %v715 = vadd.f32 %v663, %v714
        %v716 = vpop.f32.mrb[0].mxu0
        %v717 = vpop.f32.mrb[0].mxu0
        %v718 = vpop.f32.mrb[0].mxu0
        %719 = vdwg.mxu0
        %v720 = vpack.c.bf16 %v715, %v715
        %722 = vrot.lane.b32.xlu0 %v586, 120
        %v723 = vpop.permute.xlu0 %722
        %724 = vrot.lane.b32.xlu0 %v586, 112
        %v725 = vpop.permute.xlu0 %724
        %726 = vrot.lane.b32.xlu0 %v586, 104
        %v727 = vpop.permute.xlu0 %726
        %729 = vrot.lane.b32.xlu0 %v653, 120
        %v730 = vpop.permute.xlu0 %729
        %731 = vrot.lane.b32.xlu0 %v653, 112
        %v732 = vpop.permute.xlu0 %731
        %733 = vrot.lane.b32.xlu0 %v653, 104
        %v734 = vpop.permute.xlu0 %733
        %736 = vrot.lane.b32.xlu0 %v720, 120
        %v737 = vpop.permute.xlu0 %736
        %738 = vrot.lane.b32.xlu0 %v720, 112
        %v739 = vpop.permute.xlu0 %738
        %740 = vrot.lane.b32.xlu0 %v720, 104
        %v741 = vpop.permute.xlu0 %740
        %vm742 = vcmask 64512
        %v744 = vsel %vm742, %v586, 0
        %v747 = vsel %vm742, %v653, 0
        %749 = vmatprep.subr.bf16.mxu0 0
        %750 = vmatpush1.bf16.xpose.msra.mxu0 %v747
        %751 = vmatprep.subr.bf16.mxu0 0
        %752 = vmatpush1.bf16.xpose.msra.mxu0 0
        %753 = vmatprep.subr.bf16.mxu0 0
        %754 = vmatpush1.bf16.xpose.msra.mxu0 0
        %755 = vmatprep.subr.bf16.mxu0 0
        %756 = vmatpush1.bf16.xpose.msra.mxu0 0
        %757 = vmatprep.subr.bf16.mxu0 0
        %758 = vmatpush1.bf16.xpose.msra.mxu0 0
        %759 = vmatprep.subr.bf16.mxu0 0
        %760 = vmatpush1.bf16.xpose.msra.mxu0 0
        %761 = vmatprep.subr.bf16.mxu0 0
        %762 = vmatpush1.bf16.xpose.msra.mxu0 0
        %763 = vmatprep.subr.bf16.mxu0 0
        %764 = vmatpush1.bf16.xpose.msra.mxu0 0
        %765 = vmatprep.subr.bf16.mxu0 0
        %766 = vmatpush1.bf16.xpose.msra.mxu0 0
        %767 = vmatprep.subr.bf16.mxu0 0
        %768 = vmatpush1.bf16.xpose.msra.mxu0 0
        %769 = vmatprep.subr.bf16.mxu0 0
        %770 = vmatpush1.bf16.xpose.msra.mxu0 0
        %771 = vmatprep.subr.bf16.mxu0 0
        %772 = vmatpush1.bf16.xpose.msra.mxu0 0
        %773 = vmatprep.subr.bf16.mxu0 0
        %774 = vmatpush1.bf16.xpose.msra.mxu0 0
        %775 = vmatprep.subr.bf16.mxu0 0
        %776 = vmatpush1.bf16.xpose.msra.mxu0 0
        %777 = vmatprep.subr.bf16.mxu0 0
        %778 = vmatpush1.bf16.xpose.msra.mxu0 0
        %779 = vmatprep.subr.bf16.mxu0 0
        %780 = vmatpush1.bf16.xpose.msra.mxu0 0
        %781 = vmatprep.mubr.bf16.mxu0 0
        %782 = vmatmul.mubr.bf16.gmra.mrb[0].mxu0 %v744
        %v783 = vpop.f32.mrb[0].mxu0
        %v784 = vadd.f32 0.0, %v783
        %v785 = vpop.f32.mrb[0].mxu0
        %v786 = vpop.f32.mrb[0].mxu0
        %v787 = vpop.f32.mrb[0].mxu0
        %788 = vdwg.mxu0
        %v790 = vsel %vm742, %v723, 0
        %v793 = vsel %vm742, %v730, 0
        %795 = vmatprep.subr.bf16.mxu0 0
        %796 = vmatpush1.bf16.xpose.msra.mxu0 %v793
        %797 = vmatprep.subr.bf16.mxu0 0
        %798 = vmatpush1.bf16.xpose.msra.mxu0 0
        %799 = vmatprep.subr.bf16.mxu0 0
        %800 = vmatpush1.bf16.xpose.msra.mxu0 0
        %801 = vmatprep.subr.bf16.mxu0 0
        %802 = vmatpush1.bf16.xpose.msra.mxu0 0
        %803 = vmatprep.subr.bf16.mxu0 0
        %804 = vmatpush1.bf16.xpose.msra.mxu0 0
        %805 = vmatprep.subr.bf16.mxu0 0
        %806 = vmatpush1.bf16.xpose.msra.mxu0 0
        %807 = vmatprep.subr.bf16.mxu0 0
        %808 = vmatpush1.bf16.xpose.msra.mxu0 0
        %809 = vmatprep.subr.bf16.mxu0 0
        %810 = vmatpush1.bf16.xpose.msra.mxu0 0
        %811 = vmatprep.subr.bf16.mxu0 0
        %812 = vmatpush1.bf16.xpose.msra.mxu0 0
        %813 = vmatprep.subr.bf16.mxu0 0
        %814 = vmatpush1.bf16.xpose.msra.mxu0 0
        %815 = vmatprep.subr.bf16.mxu0 0
        %816 = vmatpush1.bf16.xpose.msra.mxu0 0
        %817 = vmatprep.subr.bf16.mxu0 0
        %818 = vmatpush1.bf16.xpose.msra.mxu0 0
        %819 = vmatprep.subr.bf16.mxu0 0
        %820 = vmatpush1.bf16.xpose.msra.mxu0 0
        %821 = vmatprep.subr.bf16.mxu0 0
        %822 = vmatpush1.bf16.xpose.msra.mxu0 0
        %823 = vmatprep.subr.bf16.mxu0 0
        %824 = vmatpush1.bf16.xpose.msra.mxu0 0
        %825 = vmatprep.subr.bf16.mxu0 0
        %826 = vmatpush1.bf16.xpose.msra.mxu0 0
        %827 = vmatprep.mubr.bf16.mxu0 0
        %828 = vmatmul.mubr.bf16.gmra.mrb[0].mxu0 %v790
        %v829 = vpop.f32.mrb[0].mxu0
        %v830 = vadd.f32 0.0, %v829
        %v831 = vpop.f32.mrb[0].mxu0
        %v832 = vpop.f32.mrb[0].mxu0
        %v833 = vpop.f32.mrb[0].mxu0
        %834 = vdwg.mxu0
        %v836 = vsel %vm742, %v725, 0
        %v839 = vsel %vm742, %v732, 0
        %841 = vmatprep.subr.bf16.mxu0 0
        %842 = vmatpush1.bf16.xpose.msra.mxu0 %v839
        %843 = vmatprep.subr.bf16.mxu0 0
        %844 = vmatpush1.bf16.xpose.msra.mxu0 0
        %845 = vmatprep.subr.bf16.mxu0 0
        %846 = vmatpush1.bf16.xpose.msra.mxu0 0
        %847 = vmatprep.subr.bf16.mxu0 0
        %848 = vmatpush1.bf16.xpose.msra.mxu0 0
        %849 = vmatprep.subr.bf16.mxu0 0
        %850 = vmatpush1.bf16.xpose.msra.mxu0 0
        %851 = vmatprep.subr.bf16.mxu0 0
        %852 = vmatpush1.bf16.xpose.msra.mxu0 0
        %853 = vmatprep.subr.bf16.mxu0 0
        %854 = vmatpush1.bf16.xpose.msra.mxu0 0
        %855 = vmatprep.subr.bf16.mxu0 0
        %856 = vmatpush1.bf16.xpose.msra.mxu0 0
        %857 = vmatprep.subr.bf16.mxu0 0
        %858 = vmatpush1.bf16.xpose.msra.mxu0 0
        %859 = vmatprep.subr.bf16.mxu0 0
        %860 = vmatpush1.bf16.xpose.msra.mxu0 0
        %861 = vmatprep.subr.bf16.mxu0 0
        %862 = vmatpush1.bf16.xpose.msra.mxu0 0
        %863 = vmatprep.subr.bf16.mxu0 0
        %864 = vmatpush1.bf16.xpose.msra.mxu0 0
        %865 = vmatprep.subr.bf16.mxu0 0
        %866 = vmatpush1.bf16.xpose.msra.mxu0 0
        %867 = vmatprep.subr.bf16.mxu0 0
        %868 = vmatpush1.bf16.xpose.msra.mxu0 0
        %869 = vmatprep.subr.bf16.mxu0 0
        %870 = vmatpush1.bf16.xpose.msra.mxu0 0
        %871 = vmatprep.subr.bf16.mxu0 0
        %872 = vmatpush1.bf16.xpose.msra.mxu0 0
        %873 = vmatprep.mubr.bf16.mxu0 0
        %874 = vmatmul.mubr.bf16.gmra.mrb[0].mxu0 %v836
        %v875 = vpop.f32.mrb[0].mxu0
        %v876 = vadd.f32 0.0, %v875
        %v877 = vpop.f32.mrb[0].mxu0
        %v878 = vpop.f32.mrb[0].mxu0
        %v879 = vpop.f32.mrb[0].mxu0
        %880 = vdwg.mxu0
        %v882 = vsel %vm742, %v727, 0
        %v885 = vsel %vm742, %v734, 0
        %887 = vmatprep.subr.bf16.mxu0 0
        %888 = vmatpush1.bf16.xpose.msra.mxu0 %v885
        %889 = vmatprep.subr.bf16.mxu0 0
        %890 = vmatpush1.bf16.xpose.msra.mxu0 0
        %891 = vmatprep.subr.bf16.mxu0 0
        %892 = vmatpush1.bf16.xpose.msra.mxu0 0
        %893 = vmatprep.subr.bf16.mxu0 0
        %894 = vmatpush1.bf16.xpose.msra.mxu0 0
        %895 = vmatprep.subr.bf16.mxu0 0
        %896 = vmatpush1.bf16.xpose.msra.mxu0 0
        %897 = vmatprep.subr.bf16.mxu0 0
        %898 = vmatpush1.bf16.xpose.msra.mxu0 0
        %899 = vmatprep.subr.bf16.mxu0 0
        %900 = vmatpush1.bf16.xpose.msra.mxu0 0
        %901 = vmatprep.subr.bf16.mxu0 0
        %902 = vmatpush1.bf16.xpose.msra.mxu0 0
        %903 = vmatprep.subr.bf16.mxu0 0
        %904 = vmatpush1.bf16.xpose.msra.mxu0 0
        %905 = vmatprep.subr.bf16.mxu0 0
        %906 = vmatpush1.bf16.xpose.msra.mxu0 0
        %907 = vmatprep.subr.bf16.mxu0 0
        %908 = vmatpush1.bf16.xpose.msra.mxu0 0
        %909 = vmatprep.subr.bf16.mxu0 0
        %910 = vmatpush1.bf16.xpose.msra.mxu0 0
        %911 = vmatprep.subr.bf16.mxu0 0
        %912 = vmatpush1.bf16.xpose.msra.mxu0 0
        %913 = vmatprep.subr.bf16.mxu0 0
        %914 = vmatpush1.bf16.xpose.msra.mxu0 0
        %915 = vmatprep.subr.bf16.mxu0 0
        %916 = vmatpush1.bf16.xpose.msra.mxu0 0
        %917 = vmatprep.subr.bf16.mxu0 0
        %918 = vmatpush1.bf16.xpose.msra.mxu0 0
        %919 = vmatprep.mubr.bf16.mxu0 0
        %920 = vmatmul.mubr.bf16.gmra.mrb[0].mxu0 %v882
        %v921 = vpop.f32.mrb[0].mxu0
        %v922 = vadd.f32 0.0, %v921
        %v923 = vpop.f32.mrb[0].mxu0
        %v924 = vpop.f32.mrb[0].mxu0
        %v925 = vpop.f32.mrb[0].mxu0
        %926 = vdwg.mxu0
        %v927 = vsel %vm742, %v784, -inf
        %928 = vmax.xlane.f32.xlu0 %v927
        %v929 = vpop.xlane.xlu0 %928
        %v930 = vsel %vm742, %v830, -inf
        %931 = vmax.xlane.f32.xlu0 %v930
        %v932 = vpop.xlane.xlu0 %931
        %v933 = vsel %vm742, %v876, -inf
        %934 = vmax.xlane.f32.xlu0 %v933
        %v935 = vpop.xlane.xlu0 %934
        %v936 = vsel %vm742, %v922, -inf
        %937 = vmax.xlane.f32.xlu0 %v936
        %v938 = vpop.xlane.xlu0 %937
        %v939 = vsub.f32 %v784, %v929
        %v940 = vsub.f32 %v830, %v932
        %v941 = vsub.f32 %v876, %v935
        %v942 = vsub.f32 %v922, %v938
        %v943 = vmul.f32 %v939, 1.442695
        %v944 = vpow.pop %v943
        %v945 = vmul.f32 %v940, 1.442695
        %v946 = vpow.pop %v945
        %v947 = vmul.f32 %v941, 1.442695
        %v948 = vpow.pop %v947
        %v949 = vmul.f32 %v942, 1.442695
        %v950 = vpow.pop %v949
        %v951 = vsel %vm742, %v944, 0.0
        %952 = vadd.xlane.f32.xlu0 %v951
        %v953 = vpop.xlane.xlu0 %952
        %v954 = vsel %vm742, %v946, 0.0
        %955 = vadd.xlane.f32.xlu0 %v954
        %v956 = vpop.xlane.xlu0 %955
        %v957 = vsel %vm742, %v948, 0.0
        %958 = vadd.xlane.f32.xlu0 %v957
        %v959 = vpop.xlane.xlu0 %958
        %v960 = vsel %vm742, %v950, 0.0
        %961 = vadd.xlane.f32.xlu0 %v960
        %v962 = vpop.xlane.xlu0 %961
        %v963 = vpack.c.bf16 %v944, %v944
        %v964 = vpack.c.bf16 %v946, %v946
        %v965 = vpack.c.bf16 %v948, %v948
        %v966 = vpack.c.bf16 %v950, %v950
        %v968 = vsel %vm742, %v963, 0
        %vm970 = vcmask 1043456
        %v972 = vsel %vm970, %v720, 0
        %974 = vmatprep.subr.bf16.mxu0 0
        %975 = vmatpush1.bf16.msra.mxu0 %v972
        %976 = vmatprep.subr.bf16.mxu0 0
        %977 = vmatpush1.bf16.msra.mxu0 0
        %978 = vmatprep.subr.bf16.mxu0 0
        %979 = vmatpush1.bf16.msra.mxu0 0
        %980 = vmatprep.subr.bf16.mxu0 0
        %981 = vmatpush1.bf16.msra.mxu0 0
        %982 = vmatprep.subr.bf16.mxu0 0
        %983 = vmatpush1.bf16.msra.mxu0 0
        %984 = vmatprep.subr.bf16.mxu0 0
        %985 = vmatpush1.bf16.msra.mxu0 0
        %986 = vmatprep.subr.bf16.mxu0 0
        %987 = vmatpush1.bf16.msra.mxu0 0
        %988 = vmatprep.subr.bf16.mxu0 0
        %989 = vmatpush1.bf16.msra.mxu0 0
        %990 = vmatprep.subr.bf16.mxu0 0
        %991 = vmatpush1.bf16.msra.mxu0 0
        %992 = vmatprep.subr.bf16.mxu0 0
        %993 = vmatpush1.bf16.msra.mxu0 0
        %994 = vmatprep.subr.bf16.mxu0 0
        %995 = vmatpush1.bf16.msra.mxu0 0
        %996 = vmatprep.subr.bf16.mxu0 0
        %997 = vmatpush1.bf16.msra.mxu0 0
        %998 = vmatprep.subr.bf16.mxu0 0
        %999 = vmatpush1.bf16.msra.mxu0 0
        %1000 = vmatprep.subr.bf16.mxu0 0
        %1001 = vmatpush1.bf16.msra.mxu0 0
        %1002 = vmatprep.subr.bf16.mxu0 0
        %1003 = vmatpush1.bf16.msra.mxu0 0
        %1004 = vmatprep.subr.bf16.mxu0 0
        %1005 = vmatpush1.bf16.msra.mxu0 0
        %1006 = vmatprep.mubr.bf16.mxu0 0
        %1007 = vmatmul.mubr.bf16.gmra.mrb[0].mxu0 %v968
        %v1008 = vpop.f32.mrb[0].mxu0
        %v1009 = vadd.f32 0.0, %v1008
        %v1010 = vpop.f32.mrb[0].mxu0
        %v1011 = vpop.f32.mrb[0].mxu0
        %v1012 = vpop.f32.mrb[0].mxu0
        %1013 = vdwg.mxu0
        %v1015 = vsel %vm742, %v964, 0
        %v1018 = vsel %vm970, %v737, 0
        %1020 = vmatprep.subr.bf16.mxu0 0
        %1021 = vmatpush1.bf16.msra.mxu0 %v1018
        %1022 = vmatprep.subr.bf16.mxu0 0
        %1023 = vmatpush1.bf16.msra.mxu0 0
        %1024 = vmatprep.subr.bf16.mxu0 0
        %1025 = vmatpush1.bf16.msra.mxu0 0
        %1026 = vmatprep.subr.bf16.mxu0 0
        %1027 = vmatpush1.bf16.msra.mxu0 0
        %1028 = vmatprep.subr.bf16.mxu0 0
        %1029 = vmatpush1.bf16.msra.mxu0 0
        %1030 = vmatprep.subr.bf16.mxu0 0
        %1031 = vmatpush1.bf16.msra.mxu0 0
        %1032 = vmatprep.subr.bf16.mxu0 0
        %1033 = vmatpush1.bf16.msra.mxu0 0
        %1034 = vmatprep.subr.bf16.mxu0 0
        %1035 = vmatpush1.bf16.msra.mxu0 0
        %1036 = vmatprep.subr.bf16.mxu0 0
        %1037 = vmatpush1.bf16.msra.mxu0 0
        %1038 = vmatprep.subr.bf16.mxu0 0
        %1039 = vmatpush1.bf16.msra.mxu0 0
        %1040 = vmatprep.subr.bf16.mxu0 0
        %1041 = vmatpush1.bf16.msra.mxu0 0
        %1042 = vmatprep.subr.bf16.mxu0 0
        %1043 = vmatpush1.bf16.msra.mxu0 0
        %1044 = vmatprep.subr.bf16.mxu0 0
        %1045 = vmatpush1.bf16.msra.mxu0 0
        %1046 = vmatprep.subr.bf16.mxu0 0
        %1047 = vmatpush1.bf16.msra.mxu0 0
        %1048 = vmatprep.subr.bf16.mxu0 0
        %1049 = vmatpush1.bf16.msra.mxu0 0
        %1050 = vmatprep.subr.bf16.mxu0 0
        %1051 = vmatpush1.bf16.msra.mxu0 0
        %1052 = vmatprep.mubr.bf16.mxu0 0
        %1053 = vmatmul.mubr.bf16.gmra.mrb[0].mxu0 %v1015
        %v1054 = vpop.f32.mrb[0].mxu0
        %v1055 = vadd.f32 0.0, %v1054
        %v1056 = vpop.f32.mrb[0].mxu0
        %v1057 = vpop.f32.mrb[0].mxu0
        %v1058 = vpop.f32.mrb[0].mxu0
        %1059 = vdwg.mxu0
        %v1061 = vsel %vm742, %v965, 0
        %v1064 = vsel %vm970, %v739, 0
        %1066 = vmatprep.subr.bf16.mxu0 0
        %1067 = vmatpush1.bf16.msra.mxu0 %v1064
        %1068 = vmatprep.subr.bf16.mxu0 0
        %1069 = vmatpush1.bf16.msra.mxu0 0
        %1070 = vmatprep.subr.bf16.mxu0 0
        %1071 = vmatpush1.bf16.msra.mxu0 0
        %1072 = vmatprep.subr.bf16.mxu0 0
        %1073 = vmatpush1.bf16.msra.mxu0 0
        %1074 = vmatprep.subr.bf16.mxu0 0
        %1075 = vmatpush1.bf16.msra.mxu0 0
        %1076 = vmatprep.subr.bf16.mxu0 0
        %1077 = vmatpush1.bf16.msra.mxu0 0
        %1078 = vmatprep.subr.bf16.mxu0 0
        %1079 = vmatpush1.bf16.msra.mxu0 0
        %1080 = vmatprep.subr.bf16.mxu0 0
        %1081 = vmatpush1.bf16.msra.mxu0 0
        %1082 = vmatprep.subr.bf16.mxu0 0
        %1083 = vmatpush1.bf16.msra.mxu0 0
        %1084 = vmatprep.subr.bf16.mxu0 0
        %1085 = vmatpush1.bf16.msra.mxu0 0
        %1086 = vmatprep.subr.bf16.mxu0 0
        %1087 = vmatpush1.bf16.msra.mxu0 0
        %1088 = vmatprep.subr.bf16.mxu0 0
        %1089 = vmatpush1.bf16.msra.mxu0 0
        %1090 = vmatprep.subr.bf16.mxu0 0
        %1091 = vmatpush1.bf16.msra.mxu0 0
        %1092 = vmatprep.subr.bf16.mxu0 0
        %1093 = vmatpush1.bf16.msra.mxu0 0
        %1094 = vmatprep.subr.bf16.mxu0 0
        %1095 = vmatpush1.bf16.msra.mxu0 0
        %1096 = vmatprep.subr.bf16.mxu0 0
        %1097 = vmatpush1.bf16.msra.mxu0 0
        %1098 = vmatprep.mubr.bf16.mxu0 0
        %1099 = vmatmul.mubr.bf16.gmra.mrb[0].mxu0 %v1061
        %v1100 = vpop.f32.mrb[0].mxu0
        %v1101 = vadd.f32 0.0, %v1100
        %v1102 = vpop.f32.mrb[0].mxu0
        %v1103 = vpop.f32.mrb[0].mxu0
        %v1104 = vpop.f32.mrb[0].mxu0
        %1105 = vdwg.mxu0
        %v1107 = vsel %vm742, %v966, 0
        %v1110 = vsel %vm970, %v741, 0
        %1112 = vmatprep.subr.bf16.mxu0 0
        %1113 = vmatpush1.bf16.msra.mxu0 %v1110
        %1114 = vmatprep.subr.bf16.mxu0 0
        %1115 = vmatpush1.bf16.msra.mxu0 0
        %1116 = vmatprep.subr.bf16.mxu0 0
        %1117 = vmatpush1.bf16.msra.mxu0 0
        %1118 = vmatprep.subr.bf16.mxu0 0
        %1119 = vmatpush1.bf16.msra.mxu0 0
        %1120 = vmatprep.subr.bf16.mxu0 0
        %1121 = vmatpush1.bf16.msra.mxu0 0
        %1122 = vmatprep.subr.bf16.mxu0 0
        %1123 = vmatpush1.bf16.msra.mxu0 0
        %1124 = vmatprep.subr.bf16.mxu0 0
        %1125 = vmatpush1.bf16.msra.mxu0 0
        %1126 = vmatprep.subr.bf16.mxu0 0
        %1127 = vmatpush1.bf16.msra.mxu0 0
        %1128 = vmatprep.subr.bf16.mxu0 0
        %1129 = vmatpush1.bf16.msra.mxu0 0
        %1130 = vmatprep.subr.bf16.mxu0 0
        %1131 = vmatpush1.bf16.msra.mxu0 0
        %1132 = vmatprep.subr.bf16.mxu0 0
        %1133 = vmatpush1.bf16.msra.mxu0 0
        %1134 = vmatprep.subr.bf16.mxu0 0
        %1135 = vmatpush1.bf16.msra.mxu0 0
        %1136 = vmatprep.subr.bf16.mxu0 0
        %1137 = vmatpush1.bf16.msra.mxu0 0
        %1138 = vmatprep.subr.bf16.mxu0 0
        %1139 = vmatpush1.bf16.msra.mxu0 0
        %1140 = vmatprep.subr.bf16.mxu0 0
        %1141 = vmatpush1.bf16.msra.mxu0 0
        %1142 = vmatprep.subr.bf16.mxu0 0
        %1143 = vmatpush1.bf16.msra.mxu0 0
        %1144 = vmatprep.mubr.bf16.mxu0 0
        %1145 = vmatmul.mubr.bf16.gmra.mrb[0].mxu0 %v1107
        %v1146 = vpop.f32.mrb[0].mxu0
        %v1147 = vadd.f32 0.0, %v1146
        %v1148 = vpop.f32.mrb[0].mxu0
        %v1149 = vpop.f32.mrb[0].mxu0
        %v1150 = vpop.f32.mrb[0].mxu0
        %1151 = vdwg.mxu0
        %v1152 = vrcp.pop %v953
        %v1153 = vmul.f32 %v1009, %v1152
        %v1154 = vrcp.pop %v956
        %v1155 = vmul.f32 %v1055, %v1154
        %v1156 = vrcp.pop %v959
        %v1157 = vmul.f32 %v1101, %v1156
        %v1158 = vrcp.pop %v962
        %v1159 = vmul.f32 %v1147, %v1158
        %v1160 = vpack.c.bf16 %v1153, %v1153
        %v1161 = vld [vmem:[%s9] sm:$0xf]
        %v1162 = vpack.c.bf16 %v1155, %v1155
        %v1163 = vld [vmem:[%s9 + $0x4] sm:$0xf]
        %v1165 = vsel %vm742, %v1162, 0
        %v1168 = vsel %vm970, %v1163, 0
        %1170 = vmatprep.subr.bf16.mxu0 0
        %1171 = vmatpush1.bf16.msra.mxu0 %v1168
        %1172 = vmatprep.subr.bf16.mxu0 0
        %1173 = vmatpush1.bf16.msra.mxu0 0
        %1174 = vmatprep.subr.bf16.mxu0 0
        %1175 = vmatpush1.bf16.msra.mxu0 0
        %1176 = vmatprep.subr.bf16.mxu0 0
        %1177 = vmatpush1.bf16.msra.mxu0 0
        %1178 = vmatprep.subr.bf16.mxu0 0
        %1179 = vmatpush1.bf16.msra.mxu0 0
        %1180 = vmatprep.subr.bf16.mxu0 0
        %1181 = vmatpush1.bf16.msra.mxu0 0
        %1182 = vmatprep.subr.bf16.mxu0 0
        %1183 = vmatpush1.bf16.msra.mxu0 0
        %1184 = vmatprep.subr.bf16.mxu0 0
        %1185 = vmatpush1.bf16.msra.mxu0 0
        %1186 = vmatprep.subr.bf16.mxu0 0
        %1187 = vmatpush1.bf16.msra.mxu0 0
        %1188 = vmatprep.subr.bf16.mxu0 0
        %1189 = vmatpush1.bf16.msra.mxu0 0
        %1190 = vmatprep.subr.bf16.mxu0 0
        %1191 = vmatpush1.bf16.msra.mxu0 0
        %1192 = vmatprep.subr.bf16.mxu0 0
        %1193 = vmatpush1.bf16.msra.mxu0 0
        %1194 = vmatprep.subr.bf16.mxu0 0
        %1195 = vmatpush1.bf16.msra.mxu0 0
        %1196 = vmatprep.subr.bf16.mxu0 0
        %1197 = vmatpush1.bf16.msra.mxu0 0
        %1198 = vmatprep.subr.bf16.mxu0 0
        %1199 = vmatpush1.bf16.msra.mxu0 0
        %1200 = vmatprep.subr.bf16.mxu0 0
        %1201 = vmatpush1.bf16.msra.mxu0 0
        %1202 = vmatprep.mubr.bf16.mxu0 0
        %1203 = vmatmul.mubr.bf16.gmra.mrb[0].mxu0 %v1165
        %v1204 = vpop.f32.mrb[0].mxu0
        %v1205 = vadd.f32 0.0, %v1204
        %v1206 = vpop.f32.mrb[0].mxu0
        %v1207 = vpop.f32.mrb[0].mxu0
        %v1208 = vpop.f32.mrb[0].mxu0
        %1209 = vdwg.mxu0
        %v1211 = vsel %vm742, %v1160, 0
        %v1214 = vsel %vm970, %v1161, 0
        %1216 = vmatprep.subr.bf16.mxu0 0
        %1217 = vmatpush1.bf16.msra.mxu0 %v1214
        %1218 = vmatprep.subr.bf16.mxu0 0
        %1219 = vmatpush1.bf16.msra.mxu0 0
        %1220 = vmatprep.subr.bf16.mxu0 0
        %1221 = vmatpush1.bf16.msra.mxu0 0
        %1222 = vmatprep.subr.bf16.mxu0 0
        %1223 = vmatpush1.bf16.msra.mxu0 0
        %1224 = vmatprep.subr.bf16.mxu0 0
        %1225 = vmatpush1.bf16.msra.mxu0 0
        %1226 = vmatprep.subr.bf16.mxu0 0
        %1227 = vmatpush1.bf16.msra.mxu0 0
        %1228 = vmatprep.subr.bf16.mxu0 0
        %1229 = vmatpush1.bf16.msra.mxu0 0
        %1230 = vmatprep.subr.bf16.mxu0 0
        %1231 = vmatpush1.bf16.msra.mxu0 0
        %1232 = vmatprep.subr.bf16.mxu0 0
        %1233 = vmatpush1.bf16.msra.mxu0 0
        %1234 = vmatprep.subr.bf16.mxu0 0
        %1235 = vmatpush1.bf16.msra.mxu0 0
        %1236 = vmatprep.subr.bf16.mxu0 0
        %1237 = vmatpush1.bf16.msra.mxu0 0
        %1238 = vmatprep.subr.bf16.mxu0 0
        %1239 = vmatpush1.bf16.msra.mxu0 0
        %1240 = vmatprep.subr.bf16.mxu0 0
        %1241 = vmatpush1.bf16.msra.mxu0 0
        %1242 = vmatprep.subr.bf16.mxu0 0
        %1243 = vmatpush1.bf16.msra.mxu0 0
        %1244 = vmatprep.subr.bf16.mxu0 0
        %1245 = vmatpush1.bf16.msra.mxu0 0
        %1246 = vmatprep.subr.bf16.mxu0 0
        %1247 = vmatpush1.bf16.msra.mxu0 0
        %1248 = vmatprep.mubr.bf16.mxu0 0
        %1249 = vmatmul.mubr.bf16.gmra.mrb[0].mxu0 %v1211
        %v1250 = vpop.f32.mrb[0].mxu0
        %v1251 = vadd.f32 %v1205, %v1250
        %v1252 = vpop.f32.mrb[0].mxu0
        %v1253 = vpop.f32.mrb[0].mxu0
        %v1254 = vpop.f32.mrb[0].mxu0
        %1255 = vdwg.mxu0
        %v1256 = vpack.c.bf16 %v1157, %v1157
        %v1257 = vld [vmem:[%s9 + $0x8] sm:$0xf]
        %v1259 = vsel %vm742, %v1256, 0
        %v1262 = vsel %vm970, %v1257, 0
        %1264 = vmatprep.subr.bf16.mxu0 0
        %1265 = vmatpush1.bf16.msra.mxu0 %v1262
        %1266 = vmatprep.subr.bf16.mxu0 0
        %1267 = vmatpush1.bf16.msra.mxu0 0
        %1268 = vmatprep.subr.bf16.mxu0 0
        %1269 = vmatpush1.bf16.msra.mxu0 0
        %1270 = vmatprep.subr.bf16.mxu0 0
        %1271 = vmatpush1.bf16.msra.mxu0 0
        %1272 = vmatprep.subr.bf16.mxu0 0
        %1273 = vmatpush1.bf16.msra.mxu0 0
        %1274 = vmatprep.subr.bf16.mxu0 0
        %1275 = vmatpush1.bf16.msra.mxu0 0
        %1276 = vmatprep.subr.bf16.mxu0 0
        %1277 = vmatpush1.bf16.msra.mxu0 0
        %1278 = vmatprep.subr.bf16.mxu0 0
        %1279 = vmatpush1.bf16.msra.mxu0 0
        %1280 = vmatprep.subr.bf16.mxu0 0
        %1281 = vmatpush1.bf16.msra.mxu0 0
        %1282 = vmatprep.subr.bf16.mxu0 0
        %1283 = vmatpush1.bf16.msra.mxu0 0
        %1284 = vmatprep.subr.bf16.mxu0 0
        %1285 = vmatpush1.bf16.msra.mxu0 0
        %1286 = vmatprep.subr.bf16.mxu0 0
        %1287 = vmatpush1.bf16.msra.mxu0 0
        %1288 = vmatprep.subr.bf16.mxu0 0
        %1289 = vmatpush1.bf16.msra.mxu0 0
        %1290 = vmatprep.subr.bf16.mxu0 0
        %1291 = vmatpush1.bf16.msra.mxu0 0
        %1292 = vmatprep.subr.bf16.mxu0 0
        %1293 = vmatpush1.bf16.msra.mxu0 0
        %1294 = vmatprep.subr.bf16.mxu0 0
        %1295 = vmatpush1.bf16.msra.mxu0 0
        %1296 = vmatprep.mubr.bf16.mxu0 0
        %1297 = vmatmul.mubr.bf16.gmra.mrb[0].mxu0 %v1259
        %v1298 = vpop.f32.mrb[0].mxu0
        %v1299 = vadd.f32 0.0, %v1298
        %v1300 = vpop.f32.mrb[0].mxu0
        %v1301 = vpop.f32.mrb[0].mxu0
        %v1302 = vpop.f32.mrb[0].mxu0
        %1303 = vdwg.mxu0
        %v1304 = vadd.f32 %v1251, %v1299
        %v1305 = vpack.c.bf16 %v1159, %v1159
        %v1306 = vld [vmem:[%s9 + $0xc] sm:$0xf]
        %v1308 = vsel %vm742, %v1305, 0
        %v1311 = vsel %vm970, %v1306, 0
        %1313 = vmatprep.subr.bf16.mxu0 0
        %1314 = vmatpush1.bf16.msra.mxu0 %v1311
        %1315 = vmatprep.subr.bf16.mxu0 0
        %1316 = vmatpush1.bf16.msra.mxu0 0
        %1317 = vmatprep.subr.bf16.mxu0 0
        %1318 = vmatpush1.bf16.msra.mxu0 0
        %1319 = vmatprep.subr.bf16.mxu0 0
        %1320 = vmatpush1.bf16.msra.mxu0 0
        %1321 = vmatprep.subr.bf16.mxu0 0
        %1322 = vmatpush1.bf16.msra.mxu0 0
        %1323 = vmatprep.subr.bf16.mxu0 0
        %1324 = vmatpush1.bf16.msra.mxu0 0
        %1325 = vmatprep.subr.bf16.mxu0 0
        %1326 = vmatpush1.bf16.msra.mxu0 0
        %1327 = vmatprep.subr.bf16.mxu0 0
        %1328 = vmatpush1.bf16.msra.mxu0 0
        %1329 = vmatprep.subr.bf16.mxu0 0
        %1330 = vmatpush1.bf16.msra.mxu0 0
        %1331 = vmatprep.subr.bf16.mxu0 0
        %1332 = vmatpush1.bf16.msra.mxu0 0
        %1333 = vmatprep.subr.bf16.mxu0 0
        %1334 = vmatpush1.bf16.msra.mxu0 0
        %1335 = vmatprep.subr.bf16.mxu0 0
        %1336 = vmatpush1.bf16.msra.mxu0 0
        %1337 = vmatprep.subr.bf16.mxu0 0
        %1338 = vmatpush1.bf16.msra.mxu0 0
        %1339 = vmatprep.subr.bf16.mxu0 0
        %1340 = vmatpush1.bf16.msra.mxu0 0
        %1341 = vmatprep.subr.bf16.mxu0 0
        %1342 = vmatpush1.bf16.msra.mxu0 0
        %1343 = vmatprep.subr.bf16.mxu0 0
        %1344 = vmatpush1.bf16.msra.mxu0 0
        %1345 = vmatprep.mubr.bf16.mxu0 0
        %1346 = vmatmul.mubr.bf16.gmra.mrb[0].mxu0 %v1308
        %v1347 = vpop.f32.mrb[0].mxu0
        %v1348 = vadd.f32 0.0, %v1347
        %v1349 = vpop.f32.mrb[0].mxu0
        %v1350 = vpop.f32.mrb[0].mxu0
        %v1351 = vpop.f32.mrb[0].mxu0
        %1352 = vdwg.mxu0
        %v1353 = vadd.f32 %v1304, %v1348
        %v1354 = vld [vmem:[%s10] sm:$0x1]
        %v1356 = vlaneseq
        %v1357 = vshrl.u32 %v1356, 7
        %v1358 = vsub.s32 0, %v1357
        %v1359 = vrot.slane %v1354, %v1358
        %v1361 = vadd.f32 %v1353, %v1359
        %1362 = vst.msk [vmem:[%s514] sm:$0xff] %vm542, %v1361
        %s1363 = sand.u32 %s287, 1
        %s1364 = scalar_lea.sflag [#allocation4], %s1363
        %s1365 = sand.u32 %s287, 1
        %s1366 = smul.addr %s1365, 8
        %s1367 = scalar_lea.vmem [#allocation13], %s1366
        // Predicated region
        $region89: #{tpu_custom_call.1} parent=63 // pred_check
          %p1368 = pneg %p297
        $region90: #{tpu_custom_call.1} parent=63 // pred_check_branch
          %1370 = sbr.rel (%p1368) target = $region92
        $region91: #{tpu_custom_call.1} parent=63 // pred_region
          %s1372 = ssub.s32 128, 128
          %1373 = vsyncadd %s1364, %s1372
          %s1374 = smul.addr %s33, 128
          %s1375 = scalar_lea.hbm %s11, %s1374
          %s1377 = sshll.u32 %s1367, 4
          %s1378 = int_to_ptr.vmem [resolvable:$true] %s1377
          %1380 = dma.vmem_to_hbm [thread:$0]  %s1378, 128, %s1375, %s1364
        $region92: #{tpu_custom_call.1} parent=63 // pred_fallthru
          _
      $region64: #{tpu_custom_call.1} parent=5 // pred_fallthru
        _
      %p1381 = scmp.le.s32.totalorder 2, %s28
      // Predicated region
      $region93: #{tpu_custom_call.1} parent=5 // pred_check
        %p1382 = pneg %p1381
      $region94: #{tpu_custom_call.1} parent=5 // pred_check_branch
        %1384 = sbr.rel (%p1382) target = $region96
      $region95: #{tpu_custom_call.1} parent=5 // pred_region
        %s1385 = ssub.s32 %s28, 2
        // Predicated region
        $region97: #{tpu_custom_call.1} parent=95 // pred_check
          %p1386 = pneg %p303
        $region98: #{tpu_custom_call.1} parent=95 // pred_check_branch
          %1388 = sbr.rel (%p1386) target = $region100
        $region99: #{tpu_custom_call.1} parent=95 // pred_region
          %s1389 = sand.u32 %s288, 1
          %s1390 = scalar_lea.sflag [#allocation4], %s1389
          %s1391 = sand.u32 %s288, 1
          %s1392 = smul.addr %s1391, 8
          %s1393 = scalar_lea.vmem [#allocation13], %s1392
          %1394 = dma.done %s1390, 128
        $region100: #{tpu_custom_call.1} parent=95 // pred_fallthru
          _
      $region96: #{tpu_custom_call.1} parent=5 // pred_fallthru
        _
    $region6: #{tpu_custom_call.1} parent=1 // loop_footer
      %s32 = sadd.s32 1, %s28
    $region7: #{tpu_custom_call.1} parent=1 // loop_footer_branch
      %27 = sbr.rel target = $region3
    $region8: #{tpu_custom_call.1} parent=1 // loop_exit
      _
    %1395 = vsyncpa [#allocation3], 1
    %s1396 = scalar_lea.sflag [#allocation3], 1
    %1397 = vsyncpa %s1396, 1
    %1398 = vsyncpa [#allocation6], 1
    %s1399 = scalar_lea.sflag [#allocation6], 1
    %1400 = vsyncpa %s1399, 1
    %1401 = vsyncpa [#allocation9], 1
    %1402 = vsyncpa [#allocation12], 1
    %1403 = vsyncpa [#allocation4], 1
    %s1404 = scalar_lea.sflag [#allocation4], 1
    %1405 = vsyncpa %s1404, 1

</llo_original>
